<compile_context>
chip_gen: v5e
topology: v5e:2x2
jax: 0.10.0
libtpu: 0.0.40
codegen_flags: <defaults>
</compile_context>

<pallas_src>
import jax
import jax.numpy as jnp
from jax.experimental import pallas as pl
from jax.experimental.pallas import tpu as pltpu


_CompilerParams = getattr(pltpu, "CompilerParams", None) or getattr(
    pltpu, "TPUCompilerParams", None)


def _round_up(x, m):
    return ((x + m - 1) // m) * m


def _bias_widths(CalD, RnaD, NS, K):
    """Bias widths per chain after the Linear3@Linear4 fold, fixed order."""
    Hs = (CalD + RnaD) // 2
    Hc = (CalD + NS) // 2
    Hr = (RnaD + NS) // 2
    return [Hs, 4 * K, K,                      # encoder_shared
            Hc, 4 * K, K,                      # encoder_cal
            Hr, 4 * K, K,                      # encoder_rna
            CalD // 8, CalD // 4, CalD,        # decoder_cal
            RnaD // 8, RnaD // 4, RnaD]        # decoder_rna


def _bias_layout(widths):
    """128-lane-aligned slot offsets inside the packed bias array."""
    offs, off = [], 0
    for w in widths:
        offs.append(off)
        off += _round_up(max(w, 1), 128)
    return offs, off


def _zero_nonfinite(x):
    # torch.nan_to_num(x, nan=0, posinf=0, neginf=0): zero every non-finite
    # entry. (x == x) is False for NaN; abs(x) < inf is False for +/-inf.
    ok = (x == x) & (jnp.abs(x) < jnp.float32(jnp.inf))
    return jnp.where(ok, x, jnp.float32(0.0))


def _make_kernel(CalD, RnaD, NS, K):
    widths = _bias_widths(CalD, RnaD, NS, K)
    offs, _ = _bias_layout(widths)
    LAT_PAD = _round_up(3 * K, 128)
    OFF_CAL = LAT_PAD
    OFF_RNA = OFF_CAL + _round_up(CalD, 128)

    def kernel(xcal_ref, xrna_ref, y_ref,
               ws1a, ws1b, ws2, ws34,
               wc1x, wc1y, wc2, wc34,
               wr1x, wr1y, wr2, wr34,
               wdc1a, wdc1b, wdc1c, wdc2, wdc34,
               wdr1a, wdr1b, wdr1c, wdr2, wdr34,
               b_ref, p_zsh, p_zcal, p_zrna,
               out_ref):
        def bias(i):
            off = offs[i]                       # static, 128-aligned
            return b_ref[:, off:off + widths[i]]

        def mm(a, w_ref):
            # bf16 operands, f32 accumulation on the MXU.
            return jnp.dot(a.astype(jnp.bfloat16), w_ref[...],
                           preferred_element_type=jnp.float32)

        xc = _zero_nonfinite(xcal_ref[...])
        xr = _zero_nonfinite(xrna_ref[...])
        y = y_ref[...]

        def tail(h1, bi, w2, w34):
            # ReLU -> Linear -> ReLU -> folded(Linear;Linear) (no activation)
            h = jnp.maximum(h1, 0.0)
            h = jnp.maximum(mm(h, w2) + bias(bi + 1), 0.0)
            return mm(h, w34) + bias(bi + 2)

        # encoder_shared: [nan_to_num(xcal) | nan_to_num(xrna)] (split matmul)
        z_sh = tail(mm(xc, ws1a) + mm(xr, ws1b) + bias(0), 0, ws2, ws34)
        # encoder_cal: [nan_to_num(xcal) | y]
        z_cal = tail(mm(xc, wc1x) + mm(y, wc1y) + bias(3), 3, wc2, wc34)
        # encoder_rna: [nan_to_num(xrna) | y]
        z_rna = tail(mm(xr, wr1x) + mm(y, wr1y) + bias(6), 6, wr2, wr34)
        # decoder_cal: [z_shared | z_cal | y]
        xhat_cal = tail(mm(z_sh, wdc1a) + mm(z_cal, wdc1b) + mm(y, wdc1c)
                        + bias(9), 9, wdc2, wdc34)
        # decoder_rna: [z_shared | z_rna | y]
        xhat_rna = tail(mm(z_sh, wdr1a) + mm(z_rna, wdr1b) + mm(y, wdr1c)
                        + bias(12), 12, wdr2, wdr34)

        # Latents: pack into one lane-dense 128-wide block with tiny (K,128)
        # f32 placement matmuls (kept in f32 so zloc outputs are not rounded).
        lat = (jnp.dot(z_sh, p_zsh[...], preferred_element_type=jnp.float32)
               + jnp.dot(z_cal, p_zcal[...], preferred_element_type=jnp.float32)
               + jnp.dot(z_rna, p_zrna[...], preferred_element_type=jnp.float32))
        out_ref[:, 0:LAT_PAD] = lat
        # xhat_*: direct sliced stores at static 128-aligned lane offsets
        # (pad lanes of the slab are never read by the wrapper).
        out_ref[:, OFF_CAL:OFF_CAL + CalD] = xhat_cal
        out_ref[:, OFF_RNA:OFF_RNA + RnaD] = xhat_rna

    return kernel, LAT_PAD, OFF_CAL, OFF_RNA


# ---------------------------------------------------------------------------
# Deterministic parameter construction (mirrors nn.Linear init shapes), with
# first-layer weights pre-split, Linear3/Linear4 folded, weights in bf16 and
# biases packed into one lane-aligned array.
# ---------------------------------------------------------------------------
def _init_linear(key, d_in, d_out):
    kw, kb = jax.random.split(key)
    bound = float(d_in) ** -0.5
    w = jax.random.uniform(kw, (d_in, d_out), jnp.float32, -bound, bound)
    b = jax.random.uniform(kb, (1, d_out), jnp.float32, -bound, bound)
    return w, b


def _init_chain(key, dims):
    ks = jax.random.split(key, len(dims) - 1)
    return [_init_linear(k, dims[i], dims[i + 1]) for i, k in enumerate(ks)]


def _fold_last_two(layers):
    (w1, b1), (w2, b2), (w3, b3), (w4, b4) = layers
    return (w1, b1), (w2, b2), (w3 @ w4, b3 @ w4 + b4)


def _split_rows(w, sizes):
    parts, off = [], 0
    for s in sizes:
        parts.append(w[off:off + s])
        off += s
    return parts


def init_params(key, CalD, RnaD, NS, K):
    k1, k2, k3, k4, k5 = jax.random.split(key, 5)

    enc_sh = _fold_last_two(_init_chain(
        k1, [CalD + RnaD, (CalD + RnaD) // 2, 4 * K, 2 * K, K]))
    enc_c = _fold_last_two(_init_chain(
        k2, [CalD + NS, (CalD + NS) // 2, 4 * K, 2 * K, K]))
    enc_r = _fold_last_two(_init_chain(
        k3, [RnaD + NS, (RnaD + NS) // 2, 4 * K, 2 * K, K]))
    dec_c = _fold_last_two(_init_chain(
        k4, [2 * K + NS, CalD // 8, CalD // 4, CalD // 2, CalD]))
    dec_r = _fold_last_two(_init_chain(
        k5, [2 * K + NS, RnaD // 8, RnaD // 4, RnaD // 2, RnaD]))

    (ws1, bs1), (ws2, bs2), (ws34, bs34) = enc_sh
    ws1a, ws1b = _split_rows(ws1, [CalD, RnaD])
    (wc1, bc1), (wc2, bc2), (wc34, bc34) = enc_c
    wc1x, wc1y = _split_rows(wc1, [CalD, NS])
    (wr1, br1), (wr2, br2), (wr34, br34) = enc_r
    wr1x, wr1y = _split_rows(wr1, [RnaD, NS])
    (wdc1, bdc1), (wdc2, bdc2), (wdc34, bdc34) = dec_c
    wdc1a, wdc1b, wdc1c = _split_rows(wdc1, [K, K, NS])
    (wdr1, bdr1), (wdr2, bdr2), (wdr34, bdr34) = dec_r
    wdr1a, wdr1b, wdr1c = _split_rows(wdr1, [K, K, NS])

    weights = [ws1a, ws1b, ws2, ws34,
               wc1x, wc1y, wc2, wc34,
               wr1x, wr1y, wr2, wr34,
               wdc1a, wdc1b, wdc1c, wdc2, wdc34,
               wdr1a, wdr1b, wdr1c, wdr2, wdr34]
    weights = [w.astype(jnp.bfloat16) for w in weights]

    biases = [bs1, bs2, bs34, bc1, bc2, bc34, br1, br2, br34,
              bdc1, bdc2, bdc34, bdr1, bdr2, bdr34]
    widths = _bias_widths(CalD, RnaD, NS, K)
    offs, total = _bias_layout(widths)
    bias_packed = jnp.zeros((1, total), jnp.float32)
    for b, off, w in zip(biases, offs, widths):
        bias_packed = bias_packed.at[:, off:off + w].set(b)

    LAT_PAD = _round_up(3 * K, 128)
    p_zsh = jnp.eye(K, LAT_PAD, k=0, dtype=jnp.float32)
    p_zcal = jnp.eye(K, LAT_PAD, k=K, dtype=jnp.float32)
    p_zrna = jnp.eye(K, LAT_PAD, k=2 * K, dtype=jnp.float32)

    return tuple(weights) + (bias_packed, p_zsh, p_zcal, p_zrna)


# ---------------------------------------------------------------------------
# forward() semantics of MultiModSupMlpVAE_v2 (single batch of the loader).
# ---------------------------------------------------------------------------
def forward(params, xcal, xrna, y):
    B, CalD = xcal.shape
    RnaD = xrna.shape[1]
    NS = y.shape[1]
    K = params[3].shape[1]           # ws34: (4K, K)

    kernel, LAT_PAD, OFF_CAL, OFF_RNA = _make_kernel(CalD, RnaD, NS, K)
    out_pad = OFF_RNA + _round_up(RnaD, 128)

    # Batch tiling: 256 fills the v6e/v7x MXU, 128-row tiles for large B
    # (partial last block handled by Pallas), and >=2 grid steps for moderate
    # B so the "parallel" axis spans both v7x TensorCores.
    if B >= 512 and B % 256 == 0:
        tile_b = 256
    elif B > 128:
        tile_b = 128
    elif B >= 16:
        tile_b = max(8, _round_up((B + 1) // 2, 8))
    else:
        tile_b = B
    grid = (pl.cdiv(B, tile_b),)

    data_specs = [
        pl.BlockSpec((tile_b, CalD), lambda i: (i, 0)),
        pl.BlockSpec((tile_b, RnaD), lambda i: (i, 0)),
        pl.BlockSpec((tile_b, NS), lambda i: (i, 0)),
    ]
    # Weights / packed bias / placements: full-array blocks, same block every
    # grid step (DMA'd once, stay resident).
    weight_specs = [pl.BlockSpec(p.shape, lambda i: (0, 0)) for p in params]
    out_spec = pl.BlockSpec((tile_b, out_pad), lambda i: (i, 0))

    # Explicit VMEM budget from the actual resident footprint (double-buffered
    # by the pipeline), capped below physical VMEM.
    param_bytes = sum(int(p.size) * p.dtype.itemsize for p in params)
    act_bytes = tile_b * (CalD + RnaD + NS) * 4
    out_bytes = tile_b * out_pad * 4
    needed = 2 * (param_bytes + act_bytes + out_bytes) + (8 << 20)
    cap = 64 << 20
    try:
        if hasattr(pltpu, "get_tpu_info"):
            cap = int(getattr(pltpu.get_tpu_info(), "vmem_capacity_bytes", cap))
    except Exception:
        pass
    vmem_limit = int(min(max(needed, 32 << 20), int(0.9 * cap)))

    out = pl.pallas_call(
        kernel,
        out_shape=jax.ShapeDtypeStruct((B, out_pad), jnp.float32),
        grid_spec=pltpu.PrefetchScalarGridSpec(
            num_scalar_prefetch=0,
            grid=grid,
            in_specs=data_specs + weight_specs,
            out_specs=out_spec),
        compiler_params=_CompilerParams(
            dimension_semantics=("parallel",),
            vmem_limit_bytes=vmem_limit),
    )(xcal, xrna, y, *params)

    zloc_shared = out[:, 0:K]
    zloc_cal = out[:, K:2 * K]
    zloc_rna = out[:, 2 * K:3 * K]
    xhat_cal = out[:, OFF_CAL:OFF_CAL + CalD]
    xhat_rna = out[:, OFF_RNA:OFF_RNA + RnaD]
    return zloc_shared, zloc_cal, zloc_rna, xhat_cal, xhat_rna


# ---------------------------------------------------------------------------
# Pure-JAX reference using the SAME params (split/folded/bf16) but with real
# concatenations and plain f32 math (activations rounded through bf16 so the
# comparison is apples-to-apples with the kernel's bf16-operand matmuls).
# ---------------------------------------------------------------------------
def reference_forward(params, xcal, xrna, y):
    (ws1a, ws1b, ws2, ws34,
     wc1x, wc1y, wc2, wc34,
     wr1x, wr1y, wr2, wr34,
     wdc1a, wdc1b, wdc1c, wdc2, wdc34,
     wdr1a, wdr1b, wdr1c, wdr2, wdr34,
     bias_packed, _p_zsh, _p_zcal, _p_zrna) = params

    CalD = xcal.shape[1]
    RnaD = xrna.shape[1]
    NS = y.shape[1]
    K = ws34.shape[1]
    widths = _bias_widths(CalD, RnaD, NS, K)
    offs, _ = _bias_layout(widths)

    def bias(i):
        return bias_packed[:, offs[i]:offs[i] + widths[i]]

    def f(w):
        return w.astype(jnp.float32)

    def q(x):
        return x.astype(jnp.bfloat16).astype(jnp.float32)

    def chain(x, w1, b1, w2, b2, w34, b34):
        h = jnp.maximum(q(x) @ f(w1) + b1, 0.0)
        h = jnp.maximum(q(h) @ f(w2) + b2, 0.0)
        return q(h) @ f(w34) + b34

    xc = jnp.nan_to_num(xcal, nan=0.0, posinf=0.0, neginf=0.0)
    xr = jnp.nan_to_num(xrna, nan=0.0, posinf=0.0, neginf=0.0)

    z_sh = chain(jnp.concatenate([xc, xr], -1),
                 jnp.concatenate([ws1a, ws1b], 0), bias(0),
                 ws2, bias(1), ws34, bias(2))
    z_cal = chain(jnp.concatenate([xc, y], -1),
                  jnp.concatenate([wc1x, wc1y], 0), bias(3),
                  wc2, bias(4), wc34, bias(5))
    z_rna = chain(jnp.concatenate([xr, y], -1),
                  jnp.concatenate([wr1x, wr1y], 0), bias(6),
                  wr2, bias(7), wr34, bias(8))
    xhat_cal = chain(jnp.concatenate([z_sh, z_cal, y], -1),
                     jnp.concatenate([wdc1a, wdc1b, wdc1c], 0), bias(9),
                     wdc2, bias(10), wdc34, bias(11))
    xhat_rna = chain(jnp.concatenate([z_sh, z_rna, y], -1),
                     jnp.concatenate([wdr1a, wdr1b, wdr1c], 0), bias(12),
                     wdr2, bias(13), wdr34, bias(14))
    return z_sh, z_cal, z_rna, xhat_cal, xhat_rna


if __name__ == "__main__":
    # Small, shape-consistent configuration (CalD/RnaD divisible by 8 as the
    # torch module's integer arithmetic implies).
    B, CalD, RnaD, NS, K = 32, 64, 32, 8, 4

    root = jax.random.PRNGKey(0)
    kp, kx1, kx2, ky = jax.random.split(root, 4)

    params = init_params(kp, CalD, RnaD, NS, K)

    xcal = jax.random.normal(kx1, (B, CalD), jnp.float32)
    xrna = jax.random.normal(kx2, (B, RnaD), jnp.float32)
    # Exercise nan_to_num semantics (NaN and +/-inf all map to 0).
    xcal = xcal.at[0, 0].set(jnp.nan)
    xcal = xcal.at[1, 3].set(jnp.inf)
    xrna = xrna.at[2, 5].set(-jnp.inf)
    labels = jax.random.randint(ky, (B,), 0, NS)
    y = jax.nn.one_hot(labels, NS, dtype=jnp.float32)

    outs = jax.jit(forward)(params, xcal, xrna, y)
    outs = jax.block_until_ready(outs)

    zloc_shared, zloc_cal, zloc_rna, xhat_cal, xhat_rna = outs
    assert zloc_shared.shape == (B, K)
    assert zloc_cal.shape == (B, K)
    assert zloc_rna.shape == (B, K)
    assert xhat_cal.shape == (B, CalD)
    assert xhat_rna.shape == (B, RnaD)
    assert all(bool(jnp.all(jnp.isfinite(o))) for o in outs)

    refs = reference_forward(params, xcal, xrna, y)
    for got, want in zip(outs, refs):
        assert bool(jnp.allclose(got, want, rtol=5e-2, atol=5e-2)), \
            "Pallas kernel diverges from pure-JAX reference"

    print("KERNEL_OK")
</pallas_src>

<mosaic_0001>
module attributes {stable_mosaic.version = 11 : i64} {
  func.func @kernel(%arg0: i32, %arg1: memref<16x64xf32, #tpu.memory_space<vmem>>, %arg2: memref<16x32xf32, #tpu.memory_space<vmem>>, %arg3: memref<16x8xf32, #tpu.memory_space<vmem>>, %arg4: memref<64x48xbf16, #tpu.memory_space<vmem>>, %arg5: memref<32x48xbf16, #tpu.memory_space<vmem>>, %arg6: memref<48x16xbf16, #tpu.memory_space<vmem>>, %arg7: memref<16x4xbf16, #tpu.memory_space<vmem>>, %arg8: memref<64x36xbf16, #tpu.memory_space<vmem>>, %arg9: memref<8x36xbf16, #tpu.memory_space<vmem>>, %arg10: memref<36x16xbf16, #tpu.memory_space<vmem>>, %arg11: memref<16x4xbf16, #tpu.memory_space<vmem>>, %arg12: memref<32x20xbf16, #tpu.memory_space<vmem>>, %arg13: memref<8x20xbf16, #tpu.memory_space<vmem>>, %arg14: memref<20x16xbf16, #tpu.memory_space<vmem>>, %arg15: memref<16x4xbf16, #tpu.memory_space<vmem>>, %arg16: memref<4x8xbf16, #tpu.memory_space<vmem>>, %arg17: memref<4x8xbf16, #tpu.memory_space<vmem>>, %arg18: memref<8x8xbf16, #tpu.memory_space<vmem>>, %arg19: memref<8x16xbf16, #tpu.memory_space<vmem>>, %arg20: memref<16x64xbf16, #tpu.memory_space<vmem>>, %arg21: memref<4x4xbf16, #tpu.memory_space<vmem>>, %arg22: memref<4x4xbf16, #tpu.memory_space<vmem>>, %arg23: memref<8x4xbf16, #tpu.memory_space<vmem>>, %arg24: memref<4x8xbf16, #tpu.memory_space<vmem>>, %arg25: memref<8x32xbf16, #tpu.memory_space<vmem>>, %arg26: memref<1x1920xf32, #tpu.memory_space<vmem>>, %arg27: memref<4x128xf32, #tpu.memory_space<vmem>>, %arg28: memref<4x128xf32, #tpu.memory_space<vmem>>, %arg29: memref<4x128xf32, #tpu.memory_space<vmem>>, %arg30: memref<16x384xf32, #tpu.memory_space<vmem>>) attributes {dimension_semantics = [#tpu.dimension_semantics<parallel>], iteration_bounds = array<i64: 2>, scalar_prefetch = 0 : i64, scratch_operands = 0 : i64, tpu.core_type = #tpu.core_type<tc>, window_params = [{transform_indices = @transform_0, window_bounds = array<i64: 16, 64>}, {transform_indices = @transform_1, window_bounds = array<i64: 16, 32>}, {transform_indices = @transform_2, window_bounds = array<i64: 16, 8>}, {pipeline_mode = #tpu.pipeline_mode<synchronous>, transform_indices = @transform_3, window_bounds = array<i64: 64, 48>}, {pipeline_mode = #tpu.pipeline_mode<synchronous>, transform_indices = @transform_4, window_bounds = array<i64: 32, 48>}, {pipeline_mode = #tpu.pipeline_mode<synchronous>, transform_indices = @transform_5, window_bounds = array<i64: 48, 16>}, {pipeline_mode = #tpu.pipeline_mode<synchronous>, transform_indices = @transform_6, window_bounds = array<i64: 16, 4>}, {pipeline_mode = #tpu.pipeline_mode<synchronous>, transform_indices = @transform_7, window_bounds = array<i64: 64, 36>}, {pipeline_mode = #tpu.pipeline_mode<synchronous>, transform_indices = @transform_8, window_bounds = array<i64: 8, 36>}, {pipeline_mode = #tpu.pipeline_mode<synchronous>, transform_indices = @transform_9, window_bounds = array<i64: 36, 16>}, {pipeline_mode = #tpu.pipeline_mode<synchronous>, transform_indices = @transform_10, window_bounds = array<i64: 16, 4>}, {pipeline_mode = #tpu.pipeline_mode<synchronous>, transform_indices = @transform_11, window_bounds = array<i64: 32, 20>}, {pipeline_mode = #tpu.pipeline_mode<synchronous>, transform_indices = @transform_12, window_bounds = array<i64: 8, 20>}, {pipeline_mode = #tpu.pipeline_mode<synchronous>, transform_indices = @transform_13, window_bounds = array<i64: 20, 16>}, {pipeline_mode = #tpu.pipeline_mode<synchronous>, transform_indices = @transform_14, window_bounds = array<i64: 16, 4>}, {pipeline_mode = #tpu.pipeline_mode<synchronous>, transform_indices = @transform_15, window_bounds = array<i64: 4, 8>}, {pipeline_mode = #tpu.pipeline_mode<synchronous>, transform_indices = @transform_16, window_bounds = array<i64: 4, 8>}, {pipeline_mode = #tpu.pipeline_mode<synchronous>, transform_indices = @transform_17, window_bounds = array<i64: 8, 8>}, {pipeline_mode = #tpu.pipeline_mode<synchronous>, transform_indices = @transform_18, window_bounds = array<i64: 8, 16>}, {pipeline_mode = #tpu.pipeline_mode<synchronous>, transform_indices = @transform_19, window_bounds = array<i64: 16, 64>}, {pipeline_mode = #tpu.pipeline_mode<synchronous>, transform_indices = @transform_20, window_bounds = array<i64: 4, 4>}, {pipeline_mode = #tpu.pipeline_mode<synchronous>, transform_indices = @transform_21, window_bounds = array<i64: 4, 4>}, {pipeline_mode = #tpu.pipeline_mode<synchronous>, transform_indices = @transform_22, window_bounds = array<i64: 8, 4>}, {pipeline_mode = #tpu.pipeline_mode<synchronous>, transform_indices = @transform_23, window_bounds = array<i64: 4, 8>}, {pipeline_mode = #tpu.pipeline_mode<synchronous>, transform_indices = @transform_24, window_bounds = array<i64: 8, 32>}, {pipeline_mode = #tpu.pipeline_mode<synchronous>, transform_indices = @transform_25, window_bounds = array<i64: 1, 1920>}, {pipeline_mode = #tpu.pipeline_mode<synchronous>, transform_indices = @transform_26, window_bounds = array<i64: 4, 128>}, {pipeline_mode = #tpu.pipeline_mode<synchronous>, transform_indices = @transform_27, window_bounds = array<i64: 4, 128>}, {pipeline_mode = #tpu.pipeline_mode<synchronous>, transform_indices = @transform_28, window_bounds = array<i64: 4, 128>}, {transform_indices = @transform_29, window_bounds = array<i64: 16, 384>}]} {
    %c0 = arith.constant 0 : index
    %c0_0 = arith.constant 0 : index
    %0 = vector.load %arg1[%c0, %c0_0] : memref<16x64xf32, #tpu.memory_space<vmem>>, vector<16x64xf32>
    %1 = arith.cmpf oeq, %0, %0 : vector<16x64xf32>
    %2 = math.absf %0 : vector<16x64xf32>
    %cst = arith.constant 0x7F800000 : f32
    %3 = vector.broadcast %cst : f32 to vector<16x64xf32>
    %4 = arith.cmpf olt, %2, %3 : vector<16x64xf32>
    %5 = arith.andi %1, %4 : vector<16x64xi1>
    %cst_1 = arith.constant 0.000000e+00 : f32
    %6 = vector.broadcast %cst_1 : f32 to vector<16x64xf32>
    %7 = arith.select %5, %0, %6 : vector<16x64xi1>, vector<16x64xf32>
    %c0_2 = arith.constant 0 : index
    %c0_3 = arith.constant 0 : index
    %8 = vector.load %arg2[%c0_2, %c0_3] : memref<16x32xf32, #tpu.memory_space<vmem>>, vector<16x32xf32>
    %9 = arith.cmpf oeq, %8, %8 : vector<16x32xf32>
    %10 = math.absf %8 : vector<16x32xf32>
    %cst_4 = arith.constant 0x7F800000 : f32
    %11 = vector.broadcast %cst_4 : f32 to vector<16x32xf32>
    %12 = arith.cmpf olt, %10, %11 : vector<16x32xf32>
    %13 = arith.andi %9, %12 : vector<16x32xi1>
    %cst_5 = arith.constant 0.000000e+00 : f32
    %14 = vector.broadcast %cst_5 : f32 to vector<16x32xf32>
    %15 = arith.select %13, %8, %14 : vector<16x32xi1>, vector<16x32xf32>
    %c0_6 = arith.constant 0 : index
    %c0_7 = arith.constant 0 : index
    %16 = vector.load %arg3[%c0_6, %c0_7] : memref<16x8xf32, #tpu.memory_space<vmem>>, vector<16x8xf32>
    %17 = arith.truncf %7 : vector<16x64xf32> to vector<16x64xbf16>
    %c0_8 = arith.constant 0 : index
    %c0_9 = arith.constant 0 : index
    %18 = vector.load %arg4[%c0_8, %c0_9] : memref<64x48xbf16, #tpu.memory_space<vmem>>, vector<64x48xbf16>
    %cst_10 = arith.constant dense<0.000000e+00> : vector<16x48xf32>
    %19 = tpu.matmul %17, %18, %cst_10 {dimension_numbers = #tpu.dot_dimension_numbers<[1], [0], [0], [1], [0, 0, 1, 1], [], []>} : vector<16x64xbf16>, vector<64x48xbf16>, vector<16x48xf32> -> vector<16x48xf32>
    %20 = arith.truncf %15 : vector<16x32xf32> to vector<16x32xbf16>
    %c0_11 = arith.constant 0 : index
    %c0_12 = arith.constant 0 : index
    %21 = vector.load %arg5[%c0_11, %c0_12] : memref<32x48xbf16, #tpu.memory_space<vmem>>, vector<32x48xbf16>
    %cst_13 = arith.constant dense<0.000000e+00> : vector<16x48xf32>
    %22 = tpu.matmul %20, %21, %cst_13 {dimension_numbers = #tpu.dot_dimension_numbers<[1], [0], [0], [1], [0, 0, 1, 1], [], []>} : vector<16x32xbf16>, vector<32x48xbf16>, vector<16x48xf32> -> vector<16x48xf32>
    %23 = arith.addf %19, %22 : vector<16x48xf32>
    %c0_14 = arith.constant 0 : index
    %c0_15 = arith.constant 0 : index
    %24 = vector.load %arg26[%c0_14, %c0_15] : memref<1x1920xf32, #tpu.memory_space<vmem>>, vector<1x48xf32>
    %25 = vector.broadcast %24 : vector<1x48xf32> to vector<16x48xf32>
    %26 = arith.addf %23, %25 : vector<16x48xf32>
    %cst_16 = arith.constant 0.000000e+00 : f32
    %27 = vector.broadcast %cst_16 : f32 to vector<16x48xf32>
    %28 = arith.maximumf %26, %27 : vector<16x48xf32>
    %29 = arith.truncf %28 : vector<16x48xf32> to vector<16x48xbf16>
    %c0_17 = arith.constant 0 : index
    %c0_18 = arith.constant 0 : index
    %30 = vector.load %arg6[%c0_17, %c0_18] : memref<48x16xbf16, #tpu.memory_space<vmem>>, vector<48x16xbf16>
    %cst_19 = arith.constant dense<0.000000e+00> : vector<16x16xf32>
    %31 = tpu.matmul %29, %30, %cst_19 {dimension_numbers = #tpu.dot_dimension_numbers<[1], [0], [0], [1], [0, 0, 1, 1], [], []>} : vector<16x48xbf16>, vector<48x16xbf16>, vector<16x16xf32> -> vector<16x16xf32>
    %c0_20 = arith.constant 0 : index
    %c128 = arith.constant 128 : index
    %32 = vector.load %arg26[%c0_20, %c128] : memref<1x1920xf32, #tpu.memory_space<vmem>>, vector<1x16xf32>
    %33 = vector.broadcast %32 : vector<1x16xf32> to vector<16x16xf32>
    %34 = arith.addf %31, %33 : vector<16x16xf32>
    %cst_21 = arith.constant 0.000000e+00 : f32
    %35 = vector.broadcast %cst_21 : f32 to vector<16x16xf32>
    %36 = arith.maximumf %34, %35 : vector<16x16xf32>
    %37 = arith.truncf %36 : vector<16x16xf32> to vector<16x16xbf16>
    %c0_22 = arith.constant 0 : index
    %c0_23 = arith.constant 0 : index
    %38 = vector.load %arg7[%c0_22, %c0_23] : memref<16x4xbf16, #tpu.memory_space<vmem>>, vector<16x4xbf16>
    %cst_24 = arith.constant dense<0.000000e+00> : vector<16x4xf32>
    %39 = tpu.matmul %37, %38, %cst_24 {dimension_numbers = #tpu.dot_dimension_numbers<[1], [0], [0], [1], [0, 0, 1, 1], [], []>} : vector<16x16xbf16>, vector<16x4xbf16>, vector<16x4xf32> -> vector<16x4xf32>
    %c0_25 = arith.constant 0 : index
    %c256 = arith.constant 256 : index
    %40 = vector.load %arg26[%c0_25, %c256] : memref<1x1920xf32, #tpu.memory_space<vmem>>, vector<1x4xf32>
    %41 = vector.broadcast %40 : vector<1x4xf32> to vector<16x4xf32>
    %42 = arith.addf %39, %41 : vector<16x4xf32>
    %43 = arith.truncf %7 : vector<16x64xf32> to vector<16x64xbf16>
    %c0_26 = arith.constant 0 : index
    %c0_27 = arith.constant 0 : index
    %44 = vector.load %arg8[%c0_26, %c0_27] : memref<64x36xbf16, #tpu.memory_space<vmem>>, vector<64x36xbf16>
    %cst_28 = arith.constant dense<0.000000e+00> : vector<16x36xf32>
    %45 = tpu.matmul %43, %44, %cst_28 {dimension_numbers = #tpu.dot_dimension_numbers<[1], [0], [0], [1], [0, 0, 1, 1], [], []>} : vector<16x64xbf16>, vector<64x36xbf16>, vector<16x36xf32> -> vector<16x36xf32>
    %46 = arith.truncf %16 : vector<16x8xf32> to vector<16x8xbf16>
    %c0_29 = arith.constant 0 : index
    %c0_30 = arith.constant 0 : index
    %47 = vector.load %arg9[%c0_29, %c0_30] : memref<8x36xbf16, #tpu.memory_space<vmem>>, vector<8x36xbf16>
    %cst_31 = arith.constant dense<0.000000e+00> : vector<16x36xf32>
    %48 = tpu.matmul %46, %47, %cst_31 {dimension_numbers = #tpu.dot_dimension_numbers<[1], [0], [0], [1], [0, 0, 1, 1], [], []>} : vector<16x8xbf16>, vector<8x36xbf16>, vector<16x36xf32> -> vector<16x36xf32>
    %49 = arith.addf %45, %48 : vector<16x36xf32>
    %c0_32 = arith.constant 0 : index
    %c384 = arith.constant 384 : index
    %50 = vector.load %arg26[%c0_32, %c384] : memref<1x1920xf32, #tpu.memory_space<vmem>>, vector<1x36xf32>
    %51 = vector.broadcast %50 : vector<1x36xf32> to vector<16x36xf32>
    %52 = arith.addf %49, %51 : vector<16x36xf32>
    %cst_33 = arith.constant 0.000000e+00 : f32
    %53 = vector.broadcast %cst_33 : f32 to vector<16x36xf32>
    %54 = arith.maximumf %52, %53 : vector<16x36xf32>
    %55 = arith.truncf %54 : vector<16x36xf32> to vector<16x36xbf16>
    %c0_34 = arith.constant 0 : index
    %c0_35 = arith.constant 0 : index
    %56 = vector.load %arg10[%c0_34, %c0_35] : memref<36x16xbf16, #tpu.memory_space<vmem>>, vector<36x16xbf16>
    %cst_36 = arith.constant dense<0.000000e+00> : vector<16x16xf32>
    %57 = tpu.matmul %55, %56, %cst_36 {dimension_numbers = #tpu.dot_dimension_numbers<[1], [0], [0], [1], [0, 0, 1, 1], [], []>} : vector<16x36xbf16>, vector<36x16xbf16>, vector<16x16xf32> -> vector<16x16xf32>
    %c0_37 = arith.constant 0 : index
    %c512 = arith.constant 512 : index
    %58 = vector.load %arg26[%c0_37, %c512] : memref<1x1920xf32, #tpu.memory_space<vmem>>, vector<1x16xf32>
    %59 = vector.broadcast %58 : vector<1x16xf32> to vector<16x16xf32>
    %60 = arith.addf %57, %59 : vector<16x16xf32>
    %cst_38 = arith.constant 0.000000e+00 : f32
    %61 = vector.broadcast %cst_38 : f32 to vector<16x16xf32>
    %62 = arith.maximumf %60, %61 : vector<16x16xf32>
    %63 = arith.truncf %62 : vector<16x16xf32> to vector<16x16xbf16>
    %c0_39 = arith.constant 0 : index
    %c0_40 = arith.constant 0 : index
    %64 = vector.load %arg11[%c0_39, %c0_40] : memref<16x4xbf16, #tpu.memory_space<vmem>>, vector<16x4xbf16>
    %cst_41 = arith.constant dense<0.000000e+00> : vector<16x4xf32>
    %65 = tpu.matmul %63, %64, %cst_41 {dimension_numbers = #tpu.dot_dimension_numbers<[1], [0], [0], [1], [0, 0, 1, 1], [], []>} : vector<16x16xbf16>, vector<16x4xbf16>, vector<16x4xf32> -> vector<16x4xf32>
    %c0_42 = arith.constant 0 : index
    %c640 = arith.constant 640 : index
    %66 = vector.load %arg26[%c0_42, %c640] : memref<1x1920xf32, #tpu.memory_space<vmem>>, vector<1x4xf32>
    %67 = vector.broadcast %66 : vector<1x4xf32> to vector<16x4xf32>
    %68 = arith.addf %65, %67 : vector<16x4xf32>
    %69 = arith.truncf %15 : vector<16x32xf32> to vector<16x32xbf16>
    %c0_43 = arith.constant 0 : index
    %c0_44 = arith.constant 0 : index
    %70 = vector.load %arg12[%c0_43, %c0_44] : memref<32x20xbf16, #tpu.memory_space<vmem>>, vector<32x20xbf16>
    %cst_45 = arith.constant dense<0.000000e+00> : vector<16x20xf32>
    %71 = tpu.matmul %69, %70, %cst_45 {dimension_numbers = #tpu.dot_dimension_numbers<[1], [0], [0], [1], [0, 0, 1, 1], [], []>} : vector<16x32xbf16>, vector<32x20xbf16>, vector<16x20xf32> -> vector<16x20xf32>
    %72 = arith.truncf %16 : vector<16x8xf32> to vector<16x8xbf16>
    %c0_46 = arith.constant 0 : index
    %c0_47 = arith.constant 0 : index
    %73 = vector.load %arg13[%c0_46, %c0_47] : memref<8x20xbf16, #tpu.memory_space<vmem>>, vector<8x20xbf16>
    %cst_48 = arith.constant dense<0.000000e+00> : vector<16x20xf32>
    %74 = tpu.matmul %72, %73, %cst_48 {dimension_numbers = #tpu.dot_dimension_numbers<[1], [0], [0], [1], [0, 0, 1, 1], [], []>} : vector<16x8xbf16>, vector<8x20xbf16>, vector<16x20xf32> -> vector<16x20xf32>
    %75 = arith.addf %71, %74 : vector<16x20xf32>
    %c0_49 = arith.constant 0 : index
    %c768 = arith.constant 768 : index
    %76 = vector.load %arg26[%c0_49, %c768] : memref<1x1920xf32, #tpu.memory_space<vmem>>, vector<1x20xf32>
    %77 = vector.broadcast %76 : vector<1x20xf32> to vector<16x20xf32>
    %78 = arith.addf %75, %77 : vector<16x20xf32>
    %cst_50 = arith.constant 0.000000e+00 : f32
    %79 = vector.broadcast %cst_50 : f32 to vector<16x20xf32>
    %80 = arith.maximumf %78, %79 : vector<16x20xf32>
    %81 = arith.truncf %80 : vector<16x20xf32> to vector<16x20xbf16>
    %c0_51 = arith.constant 0 : index
    %c0_52 = arith.constant 0 : index
    %82 = vector.load %arg14[%c0_51, %c0_52] : memref<20x16xbf16, #tpu.memory_space<vmem>>, vector<20x16xbf16>
    %cst_53 = arith.constant dense<0.000000e+00> : vector<16x16xf32>
    %83 = tpu.matmul %81, %82, %cst_53 {dimension_numbers = #tpu.dot_dimension_numbers<[1], [0], [0], [1], [0, 0, 1, 1], [], []>} : vector<16x20xbf16>, vector<20x16xbf16>, vector<16x16xf32> -> vector<16x16xf32>
    %c0_54 = arith.constant 0 : index
    %c896 = arith.constant 896 : index
    %84 = vector.load %arg26[%c0_54, %c896] : memref<1x1920xf32, #tpu.memory_space<vmem>>, vector<1x16xf32>
    %85 = vector.broadcast %84 : vector<1x16xf32> to vector<16x16xf32>
    %86 = arith.addf %83, %85 : vector<16x16xf32>
    %cst_55 = arith.constant 0.000000e+00 : f32
    %87 = vector.broadcast %cst_55 : f32 to vector<16x16xf32>
    %88 = arith.maximumf %86, %87 : vector<16x16xf32>
    %89 = arith.truncf %88 : vector<16x16xf32> to vector<16x16xbf16>
    %c0_56 = arith.constant 0 : index
    %c0_57 = arith.constant 0 : index
    %90 = vector.load %arg15[%c0_56, %c0_57] : memref<16x4xbf16, #tpu.memory_space<vmem>>, vector<16x4xbf16>
    %cst_58 = arith.constant dense<0.000000e+00> : vector<16x4xf32>
    %91 = tpu.matmul %89, %90, %cst_58 {dimension_numbers = #tpu.dot_dimension_numbers<[1], [0], [0], [1], [0, 0, 1, 1], [], []>} : vector<16x16xbf16>, vector<16x4xbf16>, vector<16x4xf32> -> vector<16x4xf32>
    %c0_59 = arith.constant 0 : index
    %c1024 = arith.constant 1024 : index
    %92 = vector.load %arg26[%c0_59, %c1024] : memref<1x1920xf32, #tpu.memory_space<vmem>>, vector<1x4xf32>
    %93 = vector.broadcast %92 : vector<1x4xf32> to vector<16x4xf32>
    %94 = arith.addf %91, %93 : vector<16x4xf32>
    %95 = arith.truncf %42 : vector<16x4xf32> to vector<16x4xbf16>
    %c0_60 = arith.constant 0 : index
    %c0_61 = arith.constant 0 : index
    %96 = vector.load %arg16[%c0_60, %c0_61] : memref<4x8xbf16, #tpu.memory_space<vmem>>, vector<4x8xbf16>
    %cst_62 = arith.constant dense<0.000000e+00> : vector<16x8xf32>
    %97 = tpu.matmul %95, %96, %cst_62 {dimension_numbers = #tpu.dot_dimension_numbers<[1], [0], [0], [1], [0, 0, 1, 1], [], []>} : vector<16x4xbf16>, vector<4x8xbf16>, vector<16x8xf32> -> vector<16x8xf32>
    %98 = arith.truncf %68 : vector<16x4xf32> to vector<16x4xbf16>
    %c0_63 = arith.constant 0 : index
    %c0_64 = arith.constant 0 : index
    %99 = vector.load %arg17[%c0_63, %c0_64] : memref<4x8xbf16, #tpu.memory_space<vmem>>, vector<4x8xbf16>
    %cst_65 = arith.constant dense<0.000000e+00> : vector<16x8xf32>
    %100 = tpu.matmul %98, %99, %cst_65 {dimension_numbers = #tpu.dot_dimension_numbers<[1], [0], [0], [1], [0, 0, 1, 1], [], []>} : vector<16x4xbf16>, vector<4x8xbf16>, vector<16x8xf32> -> vector<16x8xf32>
    %101 = arith.addf %97, %100 : vector<16x8xf32>
    %102 = arith.truncf %16 : vector<16x8xf32> to vector<16x8xbf16>
    %c0_66 = arith.constant 0 : index
    %c0_67 = arith.constant 0 : index
    %103 = vector.load %arg18[%c0_66, %c0_67] : memref<8x8xbf16, #tpu.memory_space<vmem>>, vector<8x8xbf16>
    %cst_68 = arith.constant dense<0.000000e+00> : vector<16x8xf32>
    %104 = tpu.matmul %102, %103, %cst_68 {dimension_numbers = #tpu.dot_dimension_numbers<[1], [0], [0], [1], [0, 0, 1, 1], [], []>} : vector<16x8xbf16>, vector<8x8xbf16>, vector<16x8xf32> -> vector<16x8xf32>
    %105 = arith.addf %101, %104 : vector<16x8xf32>
    %c0_69 = arith.constant 0 : index
    %c1152 = arith.constant 1152 : index
    %106 = vector.load %arg26[%c0_69, %c1152] : memref<1x1920xf32, #tpu.memory_space<vmem>>, vector<1x8xf32>
    %107 = vector.broadcast %106 : vector<1x8xf32> to vector<16x8xf32>
    %108 = arith.addf %105, %107 : vector<16x8xf32>
    %cst_70 = arith.constant 0.000000e+00 : f32
    %109 = vector.broadcast %cst_70 : f32 to vector<16x8xf32>
    %110 = arith.maximumf %108, %109 : vector<16x8xf32>
    %111 = arith.truncf %110 : vector<16x8xf32> to vector<16x8xbf16>
    %c0_71 = arith.constant 0 : index
    %c0_72 = arith.constant 0 : index
    %112 = vector.load %arg19[%c0_71, %c0_72] : memref<8x16xbf16, #tpu.memory_space<vmem>>, vector<8x16xbf16>
    %cst_73 = arith.constant dense<0.000000e+00> : vector<16x16xf32>
    %113 = tpu.matmul %111, %112, %cst_73 {dimension_numbers = #tpu.dot_dimension_numbers<[1], [0], [0], [1], [0, 0, 1, 1], [], []>} : vector<16x8xbf16>, vector<8x16xbf16>, vector<16x16xf32> -> vector<16x16xf32>
    %c0_74 = arith.constant 0 : index
    %c1280 = arith.constant 1280 : index
    %114 = vector.load %arg26[%c0_74, %c1280] : memref<1x1920xf32, #tpu.memory_space<vmem>>, vector<1x16xf32>
    %115 = vector.broadcast %114 : vector<1x16xf32> to vector<16x16xf32>
    %116 = arith.addf %113, %115 : vector<16x16xf32>
    %cst_75 = arith.constant 0.000000e+00 : f32
    %117 = vector.broadcast %cst_75 : f32 to vector<16x16xf32>
    %118 = arith.maximumf %116, %117 : vector<16x16xf32>
    %119 = arith.truncf %118 : vector<16x16xf32> to vector<16x16xbf16>
    %c0_76 = arith.constant 0 : index
    %c0_77 = arith.constant 0 : index
    %120 = vector.load %arg20[%c0_76, %c0_77] : memref<16x64xbf16, #tpu.memory_space<vmem>>, vector<16x64xbf16>
    %cst_78 = arith.constant dense<0.000000e+00> : vector<16x64xf32>
    %121 = tpu.matmul %119, %120, %cst_78 {dimension_numbers = #tpu.dot_dimension_numbers<[1], [0], [0], [1], [0, 0, 1, 1], [], []>} : vector<16x16xbf16>, vector<16x64xbf16>, vector<16x64xf32> -> vector<16x64xf32>
    %c0_79 = arith.constant 0 : index
    %c1408 = arith.constant 1408 : index
    %122 = vector.load %arg26[%c0_79, %c1408] : memref<1x1920xf32, #tpu.memory_space<vmem>>, vector<1x64xf32>
    %123 = vector.broadcast %122 : vector<1x64xf32> to vector<16x64xf32>
    %124 = arith.addf %121, %123 : vector<16x64xf32>
    %125 = arith.truncf %42 : vector<16x4xf32> to vector<16x4xbf16>
    %c0_80 = arith.constant 0 : index
    %c0_81 = arith.constant 0 : index
    %126 = vector.load %arg21[%c0_80, %c0_81] : memref<4x4xbf16, #tpu.memory_space<vmem>>, vector<4x4xbf16>
    %cst_82 = arith.constant dense<0.000000e+00> : vector<16x4xf32>
    %127 = tpu.matmul %125, %126, %cst_82 {dimension_numbers = #tpu.dot_dimension_numbers<[1], [0], [0], [1], [0, 0, 1, 1], [], []>} : vector<16x4xbf16>, vector<4x4xbf16>, vector<16x4xf32> -> vector<16x4xf32>
    %128 = arith.truncf %94 : vector<16x4xf32> to vector<16x4xbf16>
    %c0_83 = arith.constant 0 : index
    %c0_84 = arith.constant 0 : index
    %129 = vector.load %arg22[%c0_83, %c0_84] : memref<4x4xbf16, #tpu.memory_space<vmem>>, vector<4x4xbf16>
    %cst_85 = arith.constant dense<0.000000e+00> : vector<16x4xf32>
    %130 = tpu.matmul %128, %129, %cst_85 {dimension_numbers = #tpu.dot_dimension_numbers<[1], [0], [0], [1], [0, 0, 1, 1], [], []>} : vector<16x4xbf16>, vector<4x4xbf16>, vector<16x4xf32> -> vector<16x4xf32>
    %131 = arith.addf %127, %130 : vector<16x4xf32>
    %132 = arith.truncf %16 : vector<16x8xf32> to vector<16x8xbf16>
    %c0_86 = arith.constant 0 : index
    %c0_87 = arith.constant 0 : index
    %133 = vector.load %arg23[%c0_86, %c0_87] : memref<8x4xbf16, #tpu.memory_space<vmem>>, vector<8x4xbf16>
    %cst_88 = arith.constant dense<0.000000e+00> : vector<16x4xf32>
    %134 = tpu.matmul %132, %133, %cst_88 {dimension_numbers = #tpu.dot_dimension_numbers<[1], [0], [0], [1], [0, 0, 1, 1], [], []>} : vector<16x8xbf16>, vector<8x4xbf16>, vector<16x4xf32> -> vector<16x4xf32>
    %135 = arith.addf %131, %134 : vector<16x4xf32>
    %c0_89 = arith.constant 0 : index
    %c1536 = arith.constant 1536 : index
    %136 = vector.load %arg26[%c0_89, %c1536] : memref<1x1920xf32, #tpu.memory_space<vmem>>, vector<1x4xf32>
    %137 = vector.broadcast %136 : vector<1x4xf32> to vector<16x4xf32>
    %138 = arith.addf %135, %137 : vector<16x4xf32>
    %cst_90 = arith.constant 0.000000e+00 : f32
    %139 = vector.broadcast %cst_90 : f32 to vector<16x4xf32>
    %140 = arith.maximumf %138, %139 : vector<16x4xf32>
    %141 = arith.truncf %140 : vector<16x4xf32> to vector<16x4xbf16>
    %c0_91 = arith.constant 0 : index
    %c0_92 = arith.constant 0 : index
    %142 = vector.load %arg24[%c0_91, %c0_92] : memref<4x8xbf16, #tpu.memory_space<vmem>>, vector<4x8xbf16>
    %cst_93 = arith.constant dense<0.000000e+00> : vector<16x8xf32>
    %143 = tpu.matmul %141, %142, %cst_93 {dimension_numbers = #tpu.dot_dimension_numbers<[1], [0], [0], [1], [0, 0, 1, 1], [], []>} : vector<16x4xbf16>, vector<4x8xbf16>, vector<16x8xf32> -> vector<16x8xf32>
    %c0_94 = arith.constant 0 : index
    %c1664 = arith.constant 1664 : index
    %144 = vector.load %arg26[%c0_94, %c1664] : memref<1x1920xf32, #tpu.memory_space<vmem>>, vector<1x8xf32>
    %145 = vector.broadcast %144 : vector<1x8xf32> to vector<16x8xf32>
    %146 = arith.addf %143, %145 : vector<16x8xf32>
    %cst_95 = arith.constant 0.000000e+00 : f32
    %147 = vector.broadcast %cst_95 : f32 to vector<16x8xf32>
    %148 = arith.maximumf %146, %147 : vector<16x8xf32>
    %149 = arith.truncf %148 : vector<16x8xf32> to vector<16x8xbf16>
    %c0_96 = arith.constant 0 : index
    %c0_97 = arith.constant 0 : index
    %150 = vector.load %arg25[%c0_96, %c0_97] : memref<8x32xbf16, #tpu.memory_space<vmem>>, vector<8x32xbf16>
    %cst_98 = arith.constant dense<0.000000e+00> : vector<16x32xf32>
    %151 = tpu.matmul %149, %150, %cst_98 {dimension_numbers = #tpu.dot_dimension_numbers<[1], [0], [0], [1], [0, 0, 1, 1], [], []>} : vector<16x8xbf16>, vector<8x32xbf16>, vector<16x32xf32> -> vector<16x32xf32>
    %c0_99 = arith.constant 0 : index
    %c1792 = arith.constant 1792 : index
    %152 = vector.load %arg26[%c0_99, %c1792] : memref<1x1920xf32, #tpu.memory_space<vmem>>, vector<1x32xf32>
    %153 = vector.broadcast %152 : vector<1x32xf32> to vector<16x32xf32>
    %154 = arith.addf %151, %153 : vector<16x32xf32>
    %c0_100 = arith.constant 0 : index
    %c0_101 = arith.constant 0 : index
    %155 = vector.load %arg27[%c0_100, %c0_101] : memref<4x128xf32, #tpu.memory_space<vmem>>, vector<4x128xf32>
    %cst_102 = arith.constant dense<0.000000e+00> : vector<16x128xf32>
    %156 = tpu.matmul %42, %155, %cst_102 {dimension_numbers = #tpu.dot_dimension_numbers<[1], [0], [0], [1], [0, 0, 1, 1], [], []>} : vector<16x4xf32>, vector<4x128xf32>, vector<16x128xf32> -> vector<16x128xf32>
    %c0_103 = arith.constant 0 : index
    %c0_104 = arith.constant 0 : index
    %157 = vector.load %arg28[%c0_103, %c0_104] : memref<4x128xf32, #tpu.memory_space<vmem>>, vector<4x128xf32>
    %cst_105 = arith.constant dense<0.000000e+00> : vector<16x128xf32>
    %158 = tpu.matmul %68, %157, %cst_105 {dimension_numbers = #tpu.dot_dimension_numbers<[1], [0], [0], [1], [0, 0, 1, 1], [], []>} : vector<16x4xf32>, vector<4x128xf32>, vector<16x128xf32> -> vector<16x128xf32>
    %159 = arith.addf %156, %158 : vector<16x128xf32>
    %c0_106 = arith.constant 0 : index
    %c0_107 = arith.constant 0 : index
    %160 = vector.load %arg29[%c0_106, %c0_107] : memref<4x128xf32, #tpu.memory_space<vmem>>, vector<4x128xf32>
    %cst_108 = arith.constant dense<0.000000e+00> : vector<16x128xf32>
    %161 = tpu.matmul %94, %160, %cst_108 {dimension_numbers = #tpu.dot_dimension_numbers<[1], [0], [0], [1], [0, 0, 1, 1], [], []>} : vector<16x4xf32>, vector<4x128xf32>, vector<16x128xf32> -> vector<16x128xf32>
    %162 = arith.addf %159, %161 : vector<16x128xf32>
    %c0_109 = arith.constant 0 : index
    %c0_110 = arith.constant 0 : index
    %163 = vector.load %arg30[%c0_109, %c0_110] : memref<16x384xf32, #tpu.memory_space<vmem>>, vector<16x128xf32>
    tpu.vector_store %arg30[%c0_109, %c0_110], %162 {strides = array<i32>} : memref<16x384xf32, #tpu.memory_space<vmem>>, vector<16x128xf32>,
    %c0_111 = arith.constant 0 : index
    %c128_112 = arith.constant 128 : index
    %164 = vector.load %arg30[%c0_111, %c128_112] : memref<16x384xf32, #tpu.memory_space<vmem>>, vector<16x64xf32>
    tpu.vector_store %arg30[%c0_111, %c128_112], %124 {strides = array<i32>} : memref<16x384xf32, #tpu.memory_space<vmem>>, vector<16x64xf32>,
    %c0_113 = arith.constant 0 : index
    %c256_114 = arith.constant 256 : index
    %165 = vector.load %arg30[%c0_113, %c256_114] : memref<16x384xf32, #tpu.memory_space<vmem>>, vector<16x32xf32>
    tpu.vector_store %arg30[%c0_113, %c256_114], %154 {strides = array<i32>} : memref<16x384xf32, #tpu.memory_space<vmem>>, vector<16x32xf32>,
    return
  }
  func.func @transform_0(%arg0: i32) -> (i32, i32) {
    %c0_i32 = arith.constant 0 : i32
    %c0_i32_0 = arith.constant 0 : i32
    return %arg0, %c0_i32 : i32, i32
  }
  func.func @transform_1(%arg0: i32) -> (i32, i32) {
    %c0_i32 = arith.constant 0 : i32
    %c0_i32_0 = arith.constant 0 : i32
    return %arg0, %c0_i32 : i32, i32
  }
  func.func @transform_2(%arg0: i32) -> (i32, i32) {
    %c0_i32 = arith.constant 0 : i32
    %c0_i32_0 = arith.constant 0 : i32
    return %arg0, %c0_i32 : i32, i32
  }
  func.func @transform_3(%arg0: i32) -> (i32, i32) {
    %c0_i32 = arith.constant 0 : i32
    %c0_i32_0 = arith.constant 0 : i32
    %c0_i32_1 = arith.constant 0 : i32
    return %c0_i32, %c0_i32_0 : i32, i32
  }
  func.func @transform_4(%arg0: i32) -> (i32, i32) {
    %c0_i32 = arith.constant 0 : i32
    %c0_i32_0 = arith.constant 0 : i32
    %c0_i32_1 = arith.constant 0 : i32
    return %c0_i32, %c0_i32_0 : i32, i32
  }
  func.func @transform_5(%arg0: i32) -> (i32, i32) {
    %c0_i32 = arith.constant 0 : i32
    %c0_i32_0 = arith.constant 0 : i32
    %c0_i32_1 = arith.constant 0 : i32
    return %c0_i32, %c0_i32_0 : i32, i32
  }
  func.func @transform_6(%arg0: i32) -> (i32, i32) {
    %c0_i32 = arith.constant 0 : i32
    %c0_i32_0 = arith.constant 0 : i32
    %c0_i32_1 = arith.constant 0 : i32
    return %c0_i32, %c0_i32_0 : i32, i32
  }
  func.func @transform_7(%arg0: i32) -> (i32, i32) {
    %c0_i32 = arith.constant 0 : i32
    %c0_i32_0 = arith.constant 0 : i32
    %c0_i32_1 = arith.constant 0 : i32
    return %c0_i32, %c0_i32_0 : i32, i32
  }
  func.func @transform_8(%arg0: i32) -> (i32, i32) {
    %c0_i32 = arith.constant 0 : i32
    %c0_i32_0 = arith.constant 0 : i32
    %c0_i32_1 = arith.constant 0 : i32
    return %c0_i32, %c0_i32_0 : i32, i32
  }
  func.func @transform_9(%arg0: i32) -> (i32, i32) {
    %c0_i32 = arith.constant 0 : i32
    %c0_i32_0 = arith.constant 0 : i32
    %c0_i32_1 = arith.constant 0 : i32
    return %c0_i32, %c0_i32_0 : i32, i32
  }
  func.func @transform_10(%arg0: i32) -> (i32, i32) {
    %c0_i32 = arith.constant 0 : i32
    %c0_i32_0 = arith.constant 0 : i32
    %c0_i32_1 = arith.constant 0 : i32
    return %c0_i32, %c0_i32_0 : i32, i32
  }
  func.func @transform_11(%arg0: i32) -> (i32, i32) {
    %c0_i32 = arith.constant 0 : i32
    %c0_i32_0 = arith.constant 0 : i32
    %c0_i32_1 = arith.constant 0 : i32
    return %c0_i32, %c0_i32_0 : i32, i32
  }
  func.func @transform_12(%arg0: i32) -> (i32, i32) {
    %c0_i32 = arith.constant 0 : i32
    %c0_i32_0 = arith.constant 0 : i32
    %c0_i32_1 = arith.constant 0 : i32
    return %c0_i32, %c0_i32_0 : i32, i32
  }
  func.func @transform_13(%arg0: i32) -> (i32, i32) {
    %c0_i32 = arith.constant 0 : i32
    %c0_i32_0 = arith.constant 0 : i32
    %c0_i32_1 = arith.constant 0 : i32
    return %c0_i32, %c0_i32_0 : i32, i32
  }
  func.func @transform_14(%arg0: i32) -> (i32, i32) {
    %c0_i32 = arith.constant 0 : i32
    %c0_i32_0 = arith.constant 0 : i32
    %c0_i32_1 = arith.constant 0 : i32
    return %c0_i32, %c0_i32_0 : i32, i32
  }
  func.func @transform_15(%arg0: i32) -> (i32, i32) {
    %c0_i32 = arith.constant 0 : i32
    %c0_i32_0 = arith.constant 0 : i32
    %c0_i32_1 = arith.constant 0 : i32
    return %c0_i32, %c0_i32_0 : i32, i32
  }
  func.func @transform_16(%arg0: i32) -> (i32, i32) {
    %c0_i32 = arith.constant 0 : i32
    %c0_i32_0 = arith.constant 0 : i32
    %c0_i32_1 = arith.constant 0 : i32
    return %c0_i32, %c0_i32_0 : i32, i32
  }
  func.func @transform_17(%arg0: i32) -> (i32, i32) {
    %c0_i32 = arith.constant 0 : i32
    %c0_i32_0 = arith.constant 0 : i32
    %c0_i32_1 = arith.constant 0 : i32
    return %c0_i32, %c0_i32_0 : i32, i32
  }
  func.func @transform_18(%arg0: i32) -> (i32, i32) {
    %c0_i32 = arith.constant 0 : i32
    %c0_i32_0 = arith.constant 0 : i32
    %c0_i32_1 = arith.constant 0 : i32
    return %c0_i32, %c0_i32_0 : i32, i32
  }
  func.func @transform_19(%arg0: i32) -> (i32, i32) {
    %c0_i32 = arith.constant 0 : i32
    %c0_i32_0 = arith.constant 0 : i32
    %c0_i32_1 = arith.constant 0 : i32
    return %c0_i32, %c0_i32_0 : i32, i32
  }
  func.func @transform_20(%arg0: i32) -> (i32, i32) {
    %c0_i32 = arith.constant 0 : i32
    %c0_i32_0 = arith.constant 0 : i32
    %c0_i32_1 = arith.constant 0 : i32
    return %c0_i32, %c0_i32_0 : i32, i32
  }
  func.func @transform_21(%arg0: i32) -> (i32, i32) {
    %c0_i32 = arith.constant 0 : i32
    %c0_i32_0 = arith.constant 0 : i32
    %c0_i32_1 = arith.constant 0 : i32
    return %c0_i32, %c0_i32_0 : i32, i32
  }
  func.func @transform_22(%arg0: i32) -> (i32, i32) {
    %c0_i32 = arith.constant 0 : i32
    %c0_i32_0 = arith.constant 0 : i32
    %c0_i32_1 = arith.constant 0 : i32
    return %c0_i32, %c0_i32_0 : i32, i32
  }
  func.func @transform_23(%arg0: i32) -> (i32, i32) {
    %c0_i32 = arith.constant 0 : i32
    %c0_i32_0 = arith.constant 0 : i32
    %c0_i32_1 = arith.constant 0 : i32
    return %c0_i32, %c0_i32_0 : i32, i32
  }
  func.func @transform_24(%arg0: i32) -> (i32, i32) {
    %c0_i32 = arith.constant 0 : i32
    %c0_i32_0 = arith.constant 0 : i32
    %c0_i32_1 = arith.constant 0 : i32
    return %c0_i32, %c0_i32_0 : i32, i32
  }
  func.func @transform_25(%arg0: i32) -> (i32, i32) {
    %c0_i32 = arith.constant 0 : i32
    %c0_i32_0 = arith.constant 0 : i32
    %c0_i32_1 = arith.constant 0 : i32
    return %c0_i32, %c0_i32_0 : i32, i32
  }
  func.func @transform_26(%arg0: i32) -> (i32, i32) {
    %c0_i32 = arith.constant 0 : i32
    %c0_i32_0 = arith.constant 0 : i32
    %c0_i32_1 = arith.constant 0 : i32
    return %c0_i32, %c0_i32_0 : i32, i32
  }
  func.func @transform_27(%arg0: i32) -> (i32, i32) {
    %c0_i32 = arith.constant 0 : i32
    %c0_i32_0 = arith.constant 0 : i32
    %c0_i32_1 = arith.constant 0 : i32
    return %c0_i32, %c0_i32_0 : i32, i32
  }
  func.func @transform_28(%arg0: i32) -> (i32, i32) {
    %c0_i32 = arith.constant 0 : i32
    %c0_i32_0 = arith.constant 0 : i32
    %c0_i32_1 = arith.constant 0 : i32
    return %c0_i32, %c0_i32_0 : i32, i32
  }
  func.func @transform_29(%arg0: i32) -> (i32, i32) {
    %c0_i32 = arith.constant 0 : i32
    %c0_i32_0 = arith.constant 0 : i32
    return %arg0, %c0_i32 : i32, i32
  }
}

</mosaic_0001>

<llo_original>
// kernel: forward.1
$region0: #{forward.1}
  #allocation0 [shape = 'u32[]', space=smem, size = 0x4, offset = 0x4, fixed_abs, tag = 'smem constant byte address 0x4 - core index']
  #allocation1 [shape = 'u32[72,128]{1,0:T(1,128)}', space=vmem, size = 0x9000, scoped, tag = 'internal scratch']
  %s0 = inlined_call_operand.smem [shape: u32[30], index: -1, kind: input, shape index: {}]
  %s1 = sld [smem:[%s0]]
  %s2 = scalar_lea.smem %s0, 1
  %s3 = sld [smem:[%s2]]
  %s4 = scalar_lea.smem %s0, 2
  %s5 = sld [smem:[%s4]]
  %s6 = scalar_lea.smem %s0, 3
  %s7 = sld [smem:[%s6]]
  %s8 = scalar_lea.smem %s0, 4
  %s9 = sld [smem:[%s8]]
  %s10 = scalar_lea.smem %s0, 5
  %s11 = sld [smem:[%s10]]
  %s12 = scalar_lea.smem %s0, 6
  %s13 = sld [smem:[%s12]]
  %s14 = scalar_lea.smem %s0, 7
  %s15 = sld [smem:[%s14]]
  %s16 = scalar_lea.smem %s0, 8
  %s17 = sld [smem:[%s16]]
  %s18 = scalar_lea.smem %s0, 9
  %s19 = sld [smem:[%s18]]
  %s20 = scalar_lea.smem %s0, 10
  %s21 = sld [smem:[%s20]]
  %s22 = scalar_lea.smem %s0, 11
  %s23 = sld [smem:[%s22]]
  %s24 = scalar_lea.smem %s0, 12
  %s25 = sld [smem:[%s24]]
  %s26 = scalar_lea.smem %s0, 13
  %s27 = sld [smem:[%s26]]
  %s28 = scalar_lea.smem %s0, 14
  %s29 = sld [smem:[%s28]]
  %s30 = scalar_lea.smem %s0, 15
  %s31 = sld [smem:[%s30]]
  %s32 = scalar_lea.smem %s0, 16
  %s33 = sld [smem:[%s32]]
  %s34 = scalar_lea.smem %s0, 17
  %s35 = sld [smem:[%s34]]
  %s36 = scalar_lea.smem %s0, 18
  %s37 = sld [smem:[%s36]]
  %s38 = scalar_lea.smem %s0, 19
  %s39 = sld [smem:[%s38]]
  %s40 = scalar_lea.smem %s0, 20
  %s41 = sld [smem:[%s40]]
  %s42 = scalar_lea.smem %s0, 21
  %s43 = sld [smem:[%s42]]
  %s44 = scalar_lea.smem %s0, 22
  %s45 = sld [smem:[%s44]]
  %s46 = scalar_lea.smem %s0, 23
  %s47 = sld [smem:[%s46]]
  %s48 = scalar_lea.smem %s0, 24
  %s49 = sld [smem:[%s48]]
  %s50 = scalar_lea.smem %s0, 25
  %s51 = sld [smem:[%s50]]
  %s52 = scalar_lea.smem %s0, 26
  %s53 = sld [smem:[%s52]]
  %s54 = scalar_lea.smem %s0, 27
  %s55 = sld [smem:[%s54]]
  %s56 = scalar_lea.smem %s0, 28
  %s57 = sld [smem:[%s56]]
  %s58 = scalar_lea.smem %s0, 29
  %s59 = sld [smem:[%s58]]
  %s60 = sld [smem:[#allocation0]]
  $region149: #{forward.1} parent=0
    _
  %s62 = ssub.s32 1, %s60
  %s63 = scalar_select 0, %s62, %s60
  loop: start=0, step=1, limit=4
  $region2: #{forward.1} parent=0 // loop_pre_header
    _
  $region3: #{forward.1} parent=0 // loop_header
    %s65 = sphi 0, %s69
    %p66 = scmp.ge.s32.totalorder %s65, 4
    %s75 = sphi 0, %s77
    %s78 = sphi 0, %s75
    %s79 = sphi 0, %s78
    %s95 = sphi 0, %s79
    %s101 = sphi 0, %s103
    %s104 = sphi 0, %s101
    %s105 = sphi 0, %s104
    %s121 = sphi 0, %s105
    %s127 = sphi 0, %s129
    %s130 = sphi 0, %s127
    %s131 = sphi 0, %s130
    %s147 = sphi 0, %s131
    %s151 = sphi 0, %s151
    %s153 = sphi 0, %s151
    %s154 = sphi 0, %s153
    %s168 = sphi 0, %s154
    %s172 = sphi 0, %s172
    %s174 = sphi 0, %s172
    %s175 = sphi 0, %s174
    %s189 = sphi 0, %s175
    %s193 = sphi 0, %s193
    %s195 = sphi 0, %s193
    %s196 = sphi 0, %s195
    %s210 = sphi 0, %s196
    %s214 = sphi 0, %s214
    %s216 = sphi 0, %s214
    %s217 = sphi 0, %s216
    %s231 = sphi 0, %s217
    %s235 = sphi 0, %s235
    %s237 = sphi 0, %s235
    %s238 = sphi 0, %s237
    %s252 = sphi 0, %s238
    %s256 = sphi 0, %s256
    %s258 = sphi 0, %s256
    %s259 = sphi 0, %s258
    %s273 = sphi 0, %s259
    %s277 = sphi 0, %s277
    %s279 = sphi 0, %s277
    %s280 = sphi 0, %s279
    %s294 = sphi 0, %s280
    %s298 = sphi 0, %s298
    %s300 = sphi 0, %s298
    %s301 = sphi 0, %s300
    %s315 = sphi 0, %s301
    %s319 = sphi 0, %s319
    %s321 = sphi 0, %s319
    %s322 = sphi 0, %s321
    %s336 = sphi 0, %s322
    %s340 = sphi 0, %s340
    %s342 = sphi 0, %s340
    %s343 = sphi 0, %s342
    %s357 = sphi 0, %s343
    %s361 = sphi 0, %s361
    %s363 = sphi 0, %s361
    %s364 = sphi 0, %s363
    %s378 = sphi 0, %s364
    %s382 = sphi 0, %s382
    %s384 = sphi 0, %s382
    %s385 = sphi 0, %s384
    %s399 = sphi 0, %s385
    %s403 = sphi 0, %s403
    %s405 = sphi 0, %s403
    %s406 = sphi 0, %s405
    %s420 = sphi 0, %s406
    %s424 = sphi 0, %s424
    %s426 = sphi 0, %s424
    %s427 = sphi 0, %s426
    %s441 = sphi 0, %s427
    %s445 = sphi 0, %s445
    %s447 = sphi 0, %s445
    %s448 = sphi 0, %s447
    %s462 = sphi 0, %s448
    %s466 = sphi 0, %s466
    %s468 = sphi 0, %s466
    %s469 = sphi 0, %s468
    %s483 = sphi 0, %s469
    %s487 = sphi 0, %s487
    %s489 = sphi 0, %s487
    %s490 = sphi 0, %s489
    %s504 = sphi 0, %s490
    %s508 = sphi 0, %s508
    %s510 = sphi 0, %s508
    %s511 = sphi 0, %s510
    %s525 = sphi 0, %s511
    %s529 = sphi 0, %s529
    %s531 = sphi 0, %s529
    %s532 = sphi 0, %s531
    %s546 = sphi 0, %s532
    %s550 = sphi 0, %s550
    %s552 = sphi 0, %s550
    %s553 = sphi 0, %s552
    %s567 = sphi 0, %s553
    %s571 = sphi 0, %s571
    %s573 = sphi 0, %s571
    %s574 = sphi 0, %s573
    %s588 = sphi 0, %s574
    %s592 = sphi 0, %s592
    %s594 = sphi 0, %s592
    %s595 = sphi 0, %s594
    %s609 = sphi 0, %s595
    %s613 = sphi 0, %s613
    %s615 = sphi 0, %s613
    %s616 = sphi 0, %s615
    %s630 = sphi 0, %s616
    %s634 = sphi 0, %s634
    %s636 = sphi 0, %s634
    %s637 = sphi 0, %s636
    %s651 = sphi 0, %s637
    %s655 = sphi 0, %s655
    %s657 = sphi 0, %s655
    %s658 = sphi 0, %s657
    %s672 = sphi 0, %s658
    %s676 = sphi 0, %s676
    %s678 = sphi 0, %s676
    %s679 = sphi 0, %s678
    %s693 = sphi 0, %s679
    %s699 = sphi 0, %s701
    %s702 = sphi 0, %s699
    %s703 = sphi 0, %s702
    %s719 = sphi 0, %s703
  $region4: #{forward.1} parent=0 // loop_header_branch
    %68 = sbr.rel (%p66) target = $region8
  $region5: #{forward.1} parent=0 // loop_body
    %s70 = ssub.s32 %s65, 1
    %s71 = ssub.s32 %s65, 2
    %s72 = sadd.s32 %s65, 1
    %s73 = ssub.s32 %s65, %s72
    %p74 = scmp.eq.s32.totalorder %s73, 0
    %s76 = sadd.s32 %s75, 1
    %s77 = scalar_select %p74, %s75, %s76
    %p80 = pneg %p74
    %p81 = scmp.eq.s32.totalorder %s65, 1
    %p82 = por %p80, %p81
    %p83 = scmp.ne.s32.totalorder %s75, %s78
    %p84 = scmp.eq.s32.totalorder %s65, 0
    %p85 = por %p83, %p84
    %p86 = scmp.ne.s32.totalorder %s75, %s78
    %p87 = scmp.eq.s32.totalorder %s70, 1
    %p88 = por %p86, %p87
    %p89 = scmp.ne.s32.totalorder %s78, %s79
    %p90 = scmp.eq.s32.totalorder %s70, 0
    %p91 = por %p89, %p90
    %p92 = scmp.ne.s32.totalorder %s78, %s79
    %p93 = scmp.eq.s32.totalorder %s71, 1
    %p94 = por %p92, %p93
    %p96 = scmp.ne.s32.totalorder %s79, %s95
    %p97 = scmp.eq.s32.totalorder %s71, 0
    %p98 = por %p96, %p97
    %s99 = ssub.s32 %s65, %s72
    %p100 = scmp.eq.s32.totalorder %s99, 0
    %s102 = sadd.s32 %s101, 1
    %s103 = scalar_select %p100, %s101, %s102
    %p106 = pneg %p100
    %p107 = scmp.eq.s32.totalorder %s65, 1
    %p108 = por %p106, %p107
    %p109 = scmp.ne.s32.totalorder %s101, %s104
    %p110 = scmp.eq.s32.totalorder %s65, 0
    %p111 = por %p109, %p110
    %p112 = scmp.ne.s32.totalorder %s101, %s104
    %p113 = scmp.eq.s32.totalorder %s70, 1
    %p114 = por %p112, %p113
    %p115 = scmp.ne.s32.totalorder %s104, %s105
    %p116 = scmp.eq.s32.totalorder %s70, 0
    %p117 = por %p115, %p116
    %p118 = scmp.ne.s32.totalorder %s104, %s105
    %p119 = scmp.eq.s32.totalorder %s71, 1
    %p120 = por %p118, %p119
    %p122 = scmp.ne.s32.totalorder %s105, %s121
    %p123 = scmp.eq.s32.totalorder %s71, 0
    %p124 = por %p122, %p123
    %s125 = ssub.s32 %s65, %s72
    %p126 = scmp.eq.s32.totalorder %s125, 0
    %s128 = sadd.s32 %s127, 1
    %s129 = scalar_select %p126, %s127, %s128
    %p132 = pneg %p126
    %p133 = scmp.eq.s32.totalorder %s65, 1
    %p134 = por %p132, %p133
    %p135 = scmp.ne.s32.totalorder %s127, %s130
    %p136 = scmp.eq.s32.totalorder %s65, 0
    %p137 = por %p135, %p136
    %p138 = scmp.ne.s32.totalorder %s127, %s130
    %p139 = scmp.eq.s32.totalorder %s70, 1
    %p140 = por %p138, %p139
    %p141 = scmp.ne.s32.totalorder %s130, %s131
    %p142 = scmp.eq.s32.totalorder %s70, 0
    %p143 = por %p141, %p142
    %p144 = scmp.ne.s32.totalorder %s130, %s131
    %p145 = scmp.eq.s32.totalorder %s71, 1
    %p146 = por %p144, %p145
    %p148 = scmp.ne.s32.totalorder %s131, %s147
    %p149 = scmp.eq.s32.totalorder %s71, 0
    %p150 = por %p148, %p149
    %s152 = sadd.s32 %s151, 1
    %p155 = scmp.eq.s32.totalorder %s65, 1
    %p156 = scmp.ne.s32.totalorder %s151, %s153
    %p157 = scmp.eq.s32.totalorder %s65, 0
    %p158 = por %p156, %p157
    %p159 = scmp.ne.s32.totalorder %s151, %s153
    %p160 = scmp.eq.s32.totalorder %s70, 1
    %p161 = por %p159, %p160
    %p162 = scmp.ne.s32.totalorder %s153, %s154
    %p163 = scmp.eq.s32.totalorder %s70, 0
    %p164 = por %p162, %p163
    %p165 = scmp.ne.s32.totalorder %s153, %s154
    %p166 = scmp.eq.s32.totalorder %s71, 1
    %p167 = por %p165, %p166
    %p169 = scmp.ne.s32.totalorder %s154, %s168
    %p170 = scmp.eq.s32.totalorder %s71, 0
    %p171 = por %p169, %p170
    %s173 = sadd.s32 %s172, 1
    %p176 = scmp.eq.s32.totalorder %s65, 1
    %p177 = scmp.ne.s32.totalorder %s172, %s174
    %p178 = scmp.eq.s32.totalorder %s65, 0
    %p179 = por %p177, %p178
    %p180 = scmp.ne.s32.totalorder %s172, %s174
    %p181 = scmp.eq.s32.totalorder %s70, 1
    %p182 = por %p180, %p181
    %p183 = scmp.ne.s32.totalorder %s174, %s175
    %p184 = scmp.eq.s32.totalorder %s70, 0
    %p185 = por %p183, %p184
    %p186 = scmp.ne.s32.totalorder %s174, %s175
    %p187 = scmp.eq.s32.totalorder %s71, 1
    %p188 = por %p186, %p187
    %p190 = scmp.ne.s32.totalorder %s175, %s189
    %p191 = scmp.eq.s32.totalorder %s71, 0
    %p192 = por %p190, %p191
    %s194 = sadd.s32 %s193, 1
    %p197 = scmp.eq.s32.totalorder %s65, 1
    %p198 = scmp.ne.s32.totalorder %s193, %s195
    %p199 = scmp.eq.s32.totalorder %s65, 0
    %p200 = por %p198, %p199
    %p201 = scmp.ne.s32.totalorder %s193, %s195
    %p202 = scmp.eq.s32.totalorder %s70, 1
    %p203 = por %p201, %p202
    %p204 = scmp.ne.s32.totalorder %s195, %s196
    %p205 = scmp.eq.s32.totalorder %s70, 0
    %p206 = por %p204, %p205
    %p207 = scmp.ne.s32.totalorder %s195, %s196
    %p208 = scmp.eq.s32.totalorder %s71, 1
    %p209 = por %p207, %p208
    %p211 = scmp.ne.s32.totalorder %s196, %s210
    %p212 = scmp.eq.s32.totalorder %s71, 0
    %p213 = por %p211, %p212
    %s215 = sadd.s32 %s214, 1
    %p218 = scmp.eq.s32.totalorder %s65, 1
    %p219 = scmp.ne.s32.totalorder %s214, %s216
    %p220 = scmp.eq.s32.totalorder %s65, 0
    %p221 = por %p219, %p220
    %p222 = scmp.ne.s32.totalorder %s214, %s216
    %p223 = scmp.eq.s32.totalorder %s70, 1
    %p224 = por %p222, %p223
    %p225 = scmp.ne.s32.totalorder %s216, %s217
    %p226 = scmp.eq.s32.totalorder %s70, 0
    %p227 = por %p225, %p226
    %p228 = scmp.ne.s32.totalorder %s216, %s217
    %p229 = scmp.eq.s32.totalorder %s71, 1
    %p230 = por %p228, %p229
    %p232 = scmp.ne.s32.totalorder %s217, %s231
    %p233 = scmp.eq.s32.totalorder %s71, 0
    %p234 = por %p232, %p233
    %s236 = sadd.s32 %s235, 1
    %p239 = scmp.eq.s32.totalorder %s65, 1
    %p240 = scmp.ne.s32.totalorder %s235, %s237
    %p241 = scmp.eq.s32.totalorder %s65, 0
    %p242 = por %p240, %p241
    %p243 = scmp.ne.s32.totalorder %s235, %s237
    %p244 = scmp.eq.s32.totalorder %s70, 1
    %p245 = por %p243, %p244
    %p246 = scmp.ne.s32.totalorder %s237, %s238
    %p247 = scmp.eq.s32.totalorder %s70, 0
    %p248 = por %p246, %p247
    %p249 = scmp.ne.s32.totalorder %s237, %s238
    %p250 = scmp.eq.s32.totalorder %s71, 1
    %p251 = por %p249, %p250
    %p253 = scmp.ne.s32.totalorder %s238, %s252
    %p254 = scmp.eq.s32.totalorder %s71, 0
    %p255 = por %p253, %p254
    %s257 = sadd.s32 %s256, 1
    %p260 = scmp.eq.s32.totalorder %s65, 1
    %p261 = scmp.ne.s32.totalorder %s256, %s258
    %p262 = scmp.eq.s32.totalorder %s65, 0
    %p263 = por %p261, %p262
    %p264 = scmp.ne.s32.totalorder %s256, %s258
    %p265 = scmp.eq.s32.totalorder %s70, 1
    %p266 = por %p264, %p265
    %p267 = scmp.ne.s32.totalorder %s258, %s259
    %p268 = scmp.eq.s32.totalorder %s70, 0
    %p269 = por %p267, %p268
    %p270 = scmp.ne.s32.totalorder %s258, %s259
    %p271 = scmp.eq.s32.totalorder %s71, 1
    %p272 = por %p270, %p271
    %p274 = scmp.ne.s32.totalorder %s259, %s273
    %p275 = scmp.eq.s32.totalorder %s71, 0
    %p276 = por %p274, %p275
    %s278 = sadd.s32 %s277, 1
    %p281 = scmp.eq.s32.totalorder %s65, 1
    %p282 = scmp.ne.s32.totalorder %s277, %s279
    %p283 = scmp.eq.s32.totalorder %s65, 0
    %p284 = por %p282, %p283
    %p285 = scmp.ne.s32.totalorder %s277, %s279
    %p286 = scmp.eq.s32.totalorder %s70, 1
    %p287 = por %p285, %p286
    %p288 = scmp.ne.s32.totalorder %s279, %s280
    %p289 = scmp.eq.s32.totalorder %s70, 0
    %p290 = por %p288, %p289
    %p291 = scmp.ne.s32.totalorder %s279, %s280
    %p292 = scmp.eq.s32.totalorder %s71, 1
    %p293 = por %p291, %p292
    %p295 = scmp.ne.s32.totalorder %s280, %s294
    %p296 = scmp.eq.s32.totalorder %s71, 0
    %p297 = por %p295, %p296
    %s299 = sadd.s32 %s298, 1
    %p302 = scmp.eq.s32.totalorder %s65, 1
    %p303 = scmp.ne.s32.totalorder %s298, %s300
    %p304 = scmp.eq.s32.totalorder %s65, 0
    %p305 = por %p303, %p304
    %p306 = scmp.ne.s32.totalorder %s298, %s300
    %p307 = scmp.eq.s32.totalorder %s70, 1
    %p308 = por %p306, %p307
    %p309 = scmp.ne.s32.totalorder %s300, %s301
    %p310 = scmp.eq.s32.totalorder %s70, 0
    %p311 = por %p309, %p310
    %p312 = scmp.ne.s32.totalorder %s300, %s301
    %p313 = scmp.eq.s32.totalorder %s71, 1
    %p314 = por %p312, %p313
    %p316 = scmp.ne.s32.totalorder %s301, %s315
    %p317 = scmp.eq.s32.totalorder %s71, 0
    %p318 = por %p316, %p317
    %s320 = sadd.s32 %s319, 1
    %p323 = scmp.eq.s32.totalorder %s65, 1
    %p324 = scmp.ne.s32.totalorder %s319, %s321
    %p325 = scmp.eq.s32.totalorder %s65, 0
    %p326 = por %p324, %p325
    %p327 = scmp.ne.s32.totalorder %s319, %s321
    %p328 = scmp.eq.s32.totalorder %s70, 1
    %p329 = por %p327, %p328
    %p330 = scmp.ne.s32.totalorder %s321, %s322
    %p331 = scmp.eq.s32.totalorder %s70, 0
    %p332 = por %p330, %p331
    %p333 = scmp.ne.s32.totalorder %s321, %s322
    %p334 = scmp.eq.s32.totalorder %s71, 1
    %p335 = por %p333, %p334
    %p337 = scmp.ne.s32.totalorder %s322, %s336
    %p338 = scmp.eq.s32.totalorder %s71, 0
    %p339 = por %p337, %p338
    %s341 = sadd.s32 %s340, 1
    %p344 = scmp.eq.s32.totalorder %s65, 1
    %p345 = scmp.ne.s32.totalorder %s340, %s342
    %p346 = scmp.eq.s32.totalorder %s65, 0
    %p347 = por %p345, %p346
    %p348 = scmp.ne.s32.totalorder %s340, %s342
    %p349 = scmp.eq.s32.totalorder %s70, 1
    %p350 = por %p348, %p349
    %p351 = scmp.ne.s32.totalorder %s342, %s343
    %p352 = scmp.eq.s32.totalorder %s70, 0
    %p353 = por %p351, %p352
    %p354 = scmp.ne.s32.totalorder %s342, %s343
    %p355 = scmp.eq.s32.totalorder %s71, 1
    %p356 = por %p354, %p355
    %p358 = scmp.ne.s32.totalorder %s343, %s357
    %p359 = scmp.eq.s32.totalorder %s71, 0
    %p360 = por %p358, %p359
    %s362 = sadd.s32 %s361, 1
    %p365 = scmp.eq.s32.totalorder %s65, 1
    %p366 = scmp.ne.s32.totalorder %s361, %s363
    %p367 = scmp.eq.s32.totalorder %s65, 0
    %p368 = por %p366, %p367
    %p369 = scmp.ne.s32.totalorder %s361, %s363
    %p370 = scmp.eq.s32.totalorder %s70, 1
    %p371 = por %p369, %p370
    %p372 = scmp.ne.s32.totalorder %s363, %s364
    %p373 = scmp.eq.s32.totalorder %s70, 0
    %p374 = por %p372, %p373
    %p375 = scmp.ne.s32.totalorder %s363, %s364
    %p376 = scmp.eq.s32.totalorder %s71, 1
    %p377 = por %p375, %p376
    %p379 = scmp.ne.s32.totalorder %s364, %s378
    %p380 = scmp.eq.s32.totalorder %s71, 0
    %p381 = por %p379, %p380
    %s383 = sadd.s32 %s382, 1
    %p386 = scmp.eq.s32.totalorder %s65, 1
    %p387 = scmp.ne.s32.totalorder %s382, %s384
    %p388 = scmp.eq.s32.totalorder %s65, 0
    %p389 = por %p387, %p388
    %p390 = scmp.ne.s32.totalorder %s382, %s384
    %p391 = scmp.eq.s32.totalorder %s70, 1
    %p392 = por %p390, %p391
    %p393 = scmp.ne.s32.totalorder %s384, %s385
    %p394 = scmp.eq.s32.totalorder %s70, 0
    %p395 = por %p393, %p394
    %p396 = scmp.ne.s32.totalorder %s384, %s385
    %p397 = scmp.eq.s32.totalorder %s71, 1
    %p398 = por %p396, %p397
    %p400 = scmp.ne.s32.totalorder %s385, %s399
    %p401 = scmp.eq.s32.totalorder %s71, 0
    %p402 = por %p400, %p401
    %s404 = sadd.s32 %s403, 1
    %p407 = scmp.eq.s32.totalorder %s65, 1
    %p408 = scmp.ne.s32.totalorder %s403, %s405
    %p409 = scmp.eq.s32.totalorder %s65, 0
    %p410 = por %p408, %p409
    %p411 = scmp.ne.s32.totalorder %s403, %s405
    %p412 = scmp.eq.s32.totalorder %s70, 1
    %p413 = por %p411, %p412
    %p414 = scmp.ne.s32.totalorder %s405, %s406
    %p415 = scmp.eq.s32.totalorder %s70, 0
    %p416 = por %p414, %p415
    %p417 = scmp.ne.s32.totalorder %s405, %s406
    %p418 = scmp.eq.s32.totalorder %s71, 1
    %p419 = por %p417, %p418
    %p421 = scmp.ne.s32.totalorder %s406, %s420
    %p422 = scmp.eq.s32.totalorder %s71, 0
    %p423 = por %p421, %p422
    %s425 = sadd.s32 %s424, 1
    %p428 = scmp.eq.s32.totalorder %s65, 1
    %p429 = scmp.ne.s32.totalorder %s424, %s426
    %p430 = scmp.eq.s32.totalorder %s65, 0
    %p431 = por %p429, %p430
    %p432 = scmp.ne.s32.totalorder %s424, %s426
    %p433 = scmp.eq.s32.totalorder %s70, 1
    %p434 = por %p432, %p433
    %p435 = scmp.ne.s32.totalorder %s426, %s427
    %p436 = scmp.eq.s32.totalorder %s70, 0
    %p437 = por %p435, %p436
    %p438 = scmp.ne.s32.totalorder %s426, %s427
    %p439 = scmp.eq.s32.totalorder %s71, 1
    %p440 = por %p438, %p439
    %p442 = scmp.ne.s32.totalorder %s427, %s441
    %p443 = scmp.eq.s32.totalorder %s71, 0
    %p444 = por %p442, %p443
    %s446 = sadd.s32 %s445, 1
    %p449 = scmp.eq.s32.totalorder %s65, 1
    %p450 = scmp.ne.s32.totalorder %s445, %s447
    %p451 = scmp.eq.s32.totalorder %s65, 0
    %p452 = por %p450, %p451
    %p453 = scmp.ne.s32.totalorder %s445, %s447
    %p454 = scmp.eq.s32.totalorder %s70, 1
    %p455 = por %p453, %p454
    %p456 = scmp.ne.s32.totalorder %s447, %s448
    %p457 = scmp.eq.s32.totalorder %s70, 0
    %p458 = por %p456, %p457
    %p459 = scmp.ne.s32.totalorder %s447, %s448
    %p460 = scmp.eq.s32.totalorder %s71, 1
    %p461 = por %p459, %p460
    %p463 = scmp.ne.s32.totalorder %s448, %s462
    %p464 = scmp.eq.s32.totalorder %s71, 0
    %p465 = por %p463, %p464
    %s467 = sadd.s32 %s466, 1
    %p470 = scmp.eq.s32.totalorder %s65, 1
    %p471 = scmp.ne.s32.totalorder %s466, %s468
    %p472 = scmp.eq.s32.totalorder %s65, 0
    %p473 = por %p471, %p472
    %p474 = scmp.ne.s32.totalorder %s466, %s468
    %p475 = scmp.eq.s32.totalorder %s70, 1
    %p476 = por %p474, %p475
    %p477 = scmp.ne.s32.totalorder %s468, %s469
    %p478 = scmp.eq.s32.totalorder %s70, 0
    %p479 = por %p477, %p478
    %p480 = scmp.ne.s32.totalorder %s468, %s469
    %p481 = scmp.eq.s32.totalorder %s71, 1
    %p482 = por %p480, %p481
    %p484 = scmp.ne.s32.totalorder %s469, %s483
    %p485 = scmp.eq.s32.totalorder %s71, 0
    %p486 = por %p484, %p485
    %s488 = sadd.s32 %s487, 1
    %p491 = scmp.eq.s32.totalorder %s65, 1
    %p492 = scmp.ne.s32.totalorder %s487, %s489
    %p493 = scmp.eq.s32.totalorder %s65, 0
    %p494 = por %p492, %p493
    %p495 = scmp.ne.s32.totalorder %s487, %s489
    %p496 = scmp.eq.s32.totalorder %s70, 1
    %p497 = por %p495, %p496
    %p498 = scmp.ne.s32.totalorder %s489, %s490
    %p499 = scmp.eq.s32.totalorder %s70, 0
    %p500 = por %p498, %p499
    %p501 = scmp.ne.s32.totalorder %s489, %s490
    %p502 = scmp.eq.s32.totalorder %s71, 1
    %p503 = por %p501, %p502
    %p505 = scmp.ne.s32.totalorder %s490, %s504
    %p506 = scmp.eq.s32.totalorder %s71, 0
    %p507 = por %p505, %p506
    %s509 = sadd.s32 %s508, 1
    %p512 = scmp.eq.s32.totalorder %s65, 1
    %p513 = scmp.ne.s32.totalorder %s508, %s510
    %p514 = scmp.eq.s32.totalorder %s65, 0
    %p515 = por %p513, %p514
    %p516 = scmp.ne.s32.totalorder %s508, %s510
    %p517 = scmp.eq.s32.totalorder %s70, 1
    %p518 = por %p516, %p517
    %p519 = scmp.ne.s32.totalorder %s510, %s511
    %p520 = scmp.eq.s32.totalorder %s70, 0
    %p521 = por %p519, %p520
    %p522 = scmp.ne.s32.totalorder %s510, %s511
    %p523 = scmp.eq.s32.totalorder %s71, 1
    %p524 = por %p522, %p523
    %p526 = scmp.ne.s32.totalorder %s511, %s525
    %p527 = scmp.eq.s32.totalorder %s71, 0
    %p528 = por %p526, %p527
    %s530 = sadd.s32 %s529, 1
    %p533 = scmp.eq.s32.totalorder %s65, 1
    %p534 = scmp.ne.s32.totalorder %s529, %s531
    %p535 = scmp.eq.s32.totalorder %s65, 0
    %p536 = por %p534, %p535
    %p537 = scmp.ne.s32.totalorder %s529, %s531
    %p538 = scmp.eq.s32.totalorder %s70, 1
    %p539 = por %p537, %p538
    %p540 = scmp.ne.s32.totalorder %s531, %s532
    %p541 = scmp.eq.s32.totalorder %s70, 0
    %p542 = por %p540, %p541
    %p543 = scmp.ne.s32.totalorder %s531, %s532
    %p544 = scmp.eq.s32.totalorder %s71, 1
    %p545 = por %p543, %p544
    %p547 = scmp.ne.s32.totalorder %s532, %s546
    %p548 = scmp.eq.s32.totalorder %s71, 0
    %p549 = por %p547, %p548
    %s551 = sadd.s32 %s550, 1
    %p554 = scmp.eq.s32.totalorder %s65, 1
    %p555 = scmp.ne.s32.totalorder %s550, %s552
    %p556 = scmp.eq.s32.totalorder %s65, 0
    %p557 = por %p555, %p556
    %p558 = scmp.ne.s32.totalorder %s550, %s552
    %p559 = scmp.eq.s32.totalorder %s70, 1
    %p560 = por %p558, %p559
    %p561 = scmp.ne.s32.totalorder %s552, %s553
    %p562 = scmp.eq.s32.totalorder %s70, 0
    %p563 = por %p561, %p562
    %p564 = scmp.ne.s32.totalorder %s552, %s553
    %p565 = scmp.eq.s32.totalorder %s71, 1
    %p566 = por %p564, %p565
    %p568 = scmp.ne.s32.totalorder %s553, %s567
    %p569 = scmp.eq.s32.totalorder %s71, 0
    %p570 = por %p568, %p569
    %s572 = sadd.s32 %s571, 1
    %p575 = scmp.eq.s32.totalorder %s65, 1
    %p576 = scmp.ne.s32.totalorder %s571, %s573
    %p577 = scmp.eq.s32.totalorder %s65, 0
    %p578 = por %p576, %p577
    %p579 = scmp.ne.s32.totalorder %s571, %s573
    %p580 = scmp.eq.s32.totalorder %s70, 1
    %p581 = por %p579, %p580
    %p582 = scmp.ne.s32.totalorder %s573, %s574
    %p583 = scmp.eq.s32.totalorder %s70, 0
    %p584 = por %p582, %p583
    %p585 = scmp.ne.s32.totalorder %s573, %s574
    %p586 = scmp.eq.s32.totalorder %s71, 1
    %p587 = por %p585, %p586
    %p589 = scmp.ne.s32.totalorder %s574, %s588
    %p590 = scmp.eq.s32.totalorder %s71, 0
    %p591 = por %p589, %p590
    %s593 = sadd.s32 %s592, 1
    %p596 = scmp.eq.s32.totalorder %s65, 1
    %p597 = scmp.ne.s32.totalorder %s592, %s594
    %p598 = scmp.eq.s32.totalorder %s65, 0
    %p599 = por %p597, %p598
    %p600 = scmp.ne.s32.totalorder %s592, %s594
    %p601 = scmp.eq.s32.totalorder %s70, 1
    %p602 = por %p600, %p601
    %p603 = scmp.ne.s32.totalorder %s594, %s595
    %p604 = scmp.eq.s32.totalorder %s70, 0
    %p605 = por %p603, %p604
    %p606 = scmp.ne.s32.totalorder %s594, %s595
    %p607 = scmp.eq.s32.totalorder %s71, 1
    %p608 = por %p606, %p607
    %p610 = scmp.ne.s32.totalorder %s595, %s609
    %p611 = scmp.eq.s32.totalorder %s71, 0
    %p612 = por %p610, %p611
    %s614 = sadd.s32 %s613, 1
    %p617 = scmp.eq.s32.totalorder %s65, 1
    %p618 = scmp.ne.s32.totalorder %s613, %s615
    %p619 = scmp.eq.s32.totalorder %s65, 0
    %p620 = por %p618, %p619
    %p621 = scmp.ne.s32.totalorder %s613, %s615
    %p622 = scmp.eq.s32.totalorder %s70, 1
    %p623 = por %p621, %p622
    %p624 = scmp.ne.s32.totalorder %s615, %s616
    %p625 = scmp.eq.s32.totalorder %s70, 0
    %p626 = por %p624, %p625
    %p627 = scmp.ne.s32.totalorder %s615, %s616
    %p628 = scmp.eq.s32.totalorder %s71, 1
    %p629 = por %p627, %p628
    %p631 = scmp.ne.s32.totalorder %s616, %s630
    %p632 = scmp.eq.s32.totalorder %s71, 0
    %p633 = por %p631, %p632
    %s635 = sadd.s32 %s634, 1
    %p638 = scmp.eq.s32.totalorder %s65, 1
    %p639 = scmp.ne.s32.totalorder %s634, %s636
    %p640 = scmp.eq.s32.totalorder %s65, 0
    %p641 = por %p639, %p640
    %p642 = scmp.ne.s32.totalorder %s634, %s636
    %p643 = scmp.eq.s32.totalorder %s70, 1
    %p644 = por %p642, %p643
    %p645 = scmp.ne.s32.totalorder %s636, %s637
    %p646 = scmp.eq.s32.totalorder %s70, 0
    %p647 = por %p645, %p646
    %p648 = scmp.ne.s32.totalorder %s636, %s637
    %p649 = scmp.eq.s32.totalorder %s71, 1
    %p650 = por %p648, %p649
    %p652 = scmp.ne.s32.totalorder %s637, %s651
    %p653 = scmp.eq.s32.totalorder %s71, 0
    %p654 = por %p652, %p653
    %s656 = sadd.s32 %s655, 1
    %p659 = scmp.eq.s32.totalorder %s65, 1
    %p660 = scmp.ne.s32.totalorder %s655, %s657
    %p661 = scmp.eq.s32.totalorder %s65, 0
    %p662 = por %p660, %p661
    %p663 = scmp.ne.s32.totalorder %s655, %s657
    %p664 = scmp.eq.s32.totalorder %s70, 1
    %p665 = por %p663, %p664
    %p666 = scmp.ne.s32.totalorder %s657, %s658
    %p667 = scmp.eq.s32.totalorder %s70, 0
    %p668 = por %p666, %p667
    %p669 = scmp.ne.s32.totalorder %s657, %s658
    %p670 = scmp.eq.s32.totalorder %s71, 1
    %p671 = por %p669, %p670
    %p673 = scmp.ne.s32.totalorder %s658, %s672
    %p674 = scmp.eq.s32.totalorder %s71, 0
    %p675 = por %p673, %p674
    %s677 = sadd.s32 %s676, 1
    %p680 = scmp.eq.s32.totalorder %s65, 1
    %p681 = scmp.ne.s32.totalorder %s676, %s678
    %p682 = scmp.eq.s32.totalorder %s65, 0
    %p683 = por %p681, %p682
    %p684 = scmp.ne.s32.totalorder %s676, %s678
    %p685 = scmp.eq.s32.totalorder %s70, 1
    %p686 = por %p684, %p685
    %p687 = scmp.ne.s32.totalorder %s678, %s679
    %p688 = scmp.eq.s32.totalorder %s70, 0
    %p689 = por %p687, %p688
    %p690 = scmp.ne.s32.totalorder %s678, %s679
    %p691 = scmp.eq.s32.totalorder %s71, 1
    %p692 = por %p690, %p691
    %p694 = scmp.ne.s32.totalorder %s679, %s693
    %p695 = scmp.eq.s32.totalorder %s71, 0
    %p696 = por %p694, %p695
    %s697 = ssub.s32 %s65, %s72
    %p698 = scmp.eq.s32.totalorder %s697, 0
    %s700 = sadd.s32 %s699, 1
    %s701 = scalar_select %p698, %s699, %s700
    %p704 = pneg %p698
    %p705 = scmp.eq.s32.totalorder %s65, 1
    %p706 = por %p704, %p705
    %p707 = scmp.ne.s32.totalorder %s699, %s702
    %p708 = scmp.eq.s32.totalorder %s65, 0
    %p709 = por %p707, %p708
    %p710 = scmp.ne.s32.totalorder %s699, %s702
    %p711 = scmp.eq.s32.totalorder %s70, 1
    %p712 = por %p710, %p711
    %p713 = scmp.ne.s32.totalorder %s702, %s703
    %p714 = scmp.eq.s32.totalorder %s70, 0
    %p715 = por %p713, %p714
    %p716 = scmp.ne.s32.totalorder %s702, %s703
    %p717 = scmp.eq.s32.totalorder %s71, 1
    %p718 = por %p716, %p717
    %p720 = scmp.ne.s32.totalorder %s703, %s719
    %p721 = scmp.eq.s32.totalorder %s71, 0
    %p722 = por %p720, %p721
    %p723 = scmp.le.s32.totalorder 1, %s65
    %p724 = scmp.lt.s32.totalorder %s65, 3
    %p725 = pnand %p723, %p724
    %p726 = pneg %p725
    // Predicated region
    $region9: #{forward.1} parent=5 // pred_check
      _
    $region10: #{forward.1} parent=5 // pred_check_branch
      %728 = sbr.rel (%p725) target = $region12
    $region11: #{forward.1} parent=5 // pred_region
      %s729 = ssub.s32 %s65, 1
      // Predicated region
      $region13: #{forward.1} parent=11 // pred_check
        %p730 = pneg %p164
      $region14: #{forward.1} parent=11 // pred_check_branch
        %732 = sbr.rel (%p730) target = $region16
      $region15: #{forward.1} parent=11 // pred_region
        _
      $region16: #{forward.1} parent=11 // pred_fallthru
        _
      // Predicated region
      $region17: #{forward.1} parent=11 // pred_check
        %p733 = pneg %p185
      $region18: #{forward.1} parent=11 // pred_check_branch
        %735 = sbr.rel (%p733) target = $region20
      $region19: #{forward.1} parent=11 // pred_region
        _
      $region20: #{forward.1} parent=11 // pred_fallthru
        _
      // Predicated region
      $region21: #{forward.1} parent=11 // pred_check
        %p736 = pneg %p206
      $region22: #{forward.1} parent=11 // pred_check_branch
        %738 = sbr.rel (%p736) target = $region24
      $region23: #{forward.1} parent=11 // pred_region
        _
      $region24: #{forward.1} parent=11 // pred_fallthru
        _
      // Predicated region
      $region25: #{forward.1} parent=11 // pred_check
        %p739 = pneg %p227
      $region26: #{forward.1} parent=11 // pred_check_branch
        %741 = sbr.rel (%p739) target = $region28
      $region27: #{forward.1} parent=11 // pred_region
        _
      $region28: #{forward.1} parent=11 // pred_fallthru
        _
      // Predicated region
      $region29: #{forward.1} parent=11 // pred_check
        %p742 = pneg %p248
      $region30: #{forward.1} parent=11 // pred_check_branch
        %744 = sbr.rel (%p742) target = $region32
      $region31: #{forward.1} parent=11 // pred_region
        _
      $region32: #{forward.1} parent=11 // pred_fallthru
        _
      // Predicated region
      $region33: #{forward.1} parent=11 // pred_check
        %p745 = pneg %p269
      $region34: #{forward.1} parent=11 // pred_check_branch
        %747 = sbr.rel (%p745) target = $region36
      $region35: #{forward.1} parent=11 // pred_region
        _
      $region36: #{forward.1} parent=11 // pred_fallthru
        _
      // Predicated region
      $region37: #{forward.1} parent=11 // pred_check
        %p748 = pneg %p290
      $region38: #{forward.1} parent=11 // pred_check_branch
        %750 = sbr.rel (%p748) target = $region40
      $region39: #{forward.1} parent=11 // pred_region
        _
      $region40: #{forward.1} parent=11 // pred_fallthru
        _
      // Predicated region
      $region41: #{forward.1} parent=11 // pred_check
        %p751 = pneg %p311
      $region42: #{forward.1} parent=11 // pred_check_branch
        %753 = sbr.rel (%p751) target = $region44
      $region43: #{forward.1} parent=11 // pred_region
        _
      $region44: #{forward.1} parent=11 // pred_fallthru
        _
      // Predicated region
      $region45: #{forward.1} parent=11 // pred_check
        %p754 = pneg %p332
      $region46: #{forward.1} parent=11 // pred_check_branch
        %756 = sbr.rel (%p754) target = $region48
      $region47: #{forward.1} parent=11 // pred_region
        _
      $region48: #{forward.1} parent=11 // pred_fallthru
        _
      // Predicated region
      $region49: #{forward.1} parent=11 // pred_check
        %p757 = pneg %p353
      $region50: #{forward.1} parent=11 // pred_check_branch
        %759 = sbr.rel (%p757) target = $region52
      $region51: #{forward.1} parent=11 // pred_region
        _
      $region52: #{forward.1} parent=11 // pred_fallthru
        _
      // Predicated region
      $region53: #{forward.1} parent=11 // pred_check
        %p760 = pneg %p374
      $region54: #{forward.1} parent=11 // pred_check_branch
        %762 = sbr.rel (%p760) target = $region56
      $region55: #{forward.1} parent=11 // pred_region
        _
      $region56: #{forward.1} parent=11 // pred_fallthru
        _
      // Predicated region
      $region57: #{forward.1} parent=11 // pred_check
        %p763 = pneg %p395
      $region58: #{forward.1} parent=11 // pred_check_branch
        %765 = sbr.rel (%p763) target = $region60
      $region59: #{forward.1} parent=11 // pred_region
        _
      $region60: #{forward.1} parent=11 // pred_fallthru
        _
      // Predicated region
      $region61: #{forward.1} parent=11 // pred_check
        %p766 = pneg %p416
      $region62: #{forward.1} parent=11 // pred_check_branch
        %768 = sbr.rel (%p766) target = $region64
      $region63: #{forward.1} parent=11 // pred_region
        _
      $region64: #{forward.1} parent=11 // pred_fallthru
        _
      // Predicated region
      $region65: #{forward.1} parent=11 // pred_check
        %p769 = pneg %p437
      $region66: #{forward.1} parent=11 // pred_check_branch
        %771 = sbr.rel (%p769) target = $region68
      $region67: #{forward.1} parent=11 // pred_region
        _
      $region68: #{forward.1} parent=11 // pred_fallthru
        _
      // Predicated region
      $region69: #{forward.1} parent=11 // pred_check
        %p772 = pneg %p458
      $region70: #{forward.1} parent=11 // pred_check_branch
        %774 = sbr.rel (%p772) target = $region72
      $region71: #{forward.1} parent=11 // pred_region
        _
      $region72: #{forward.1} parent=11 // pred_fallthru
        _
      // Predicated region
      $region73: #{forward.1} parent=11 // pred_check
        %p775 = pneg %p479
      $region74: #{forward.1} parent=11 // pred_check_branch
        %777 = sbr.rel (%p775) target = $region76
      $region75: #{forward.1} parent=11 // pred_region
        _
      $region76: #{forward.1} parent=11 // pred_fallthru
        _
      // Predicated region
      $region77: #{forward.1} parent=11 // pred_check
        %p778 = pneg %p500
      $region78: #{forward.1} parent=11 // pred_check_branch
        %780 = sbr.rel (%p778) target = $region80
      $region79: #{forward.1} parent=11 // pred_region
        _
      $region80: #{forward.1} parent=11 // pred_fallthru
        _
      // Predicated region
      $region81: #{forward.1} parent=11 // pred_check
        %p781 = pneg %p521
      $region82: #{forward.1} parent=11 // pred_check_branch
        %783 = sbr.rel (%p781) target = $region84
      $region83: #{forward.1} parent=11 // pred_region
        _
      $region84: #{forward.1} parent=11 // pred_fallthru
        _
      // Predicated region
      $region85: #{forward.1} parent=11 // pred_check
        %p784 = pneg %p542
      $region86: #{forward.1} parent=11 // pred_check_branch
        %786 = sbr.rel (%p784) target = $region88
      $region87: #{forward.1} parent=11 // pred_region
        _
      $region88: #{forward.1} parent=11 // pred_fallthru
        _
      // Predicated region
      $region89: #{forward.1} parent=11 // pred_check
        %p787 = pneg %p563
      $region90: #{forward.1} parent=11 // pred_check_branch
        %789 = sbr.rel (%p787) target = $region92
      $region91: #{forward.1} parent=11 // pred_region
        _
      $region92: #{forward.1} parent=11 // pred_fallthru
        _
      // Predicated region
      $region93: #{forward.1} parent=11 // pred_check
        %p790 = pneg %p584
      $region94: #{forward.1} parent=11 // pred_check_branch
        %792 = sbr.rel (%p790) target = $region96
      $region95: #{forward.1} parent=11 // pred_region
        _
      $region96: #{forward.1} parent=11 // pred_fallthru
        _
      // Predicated region
      $region97: #{forward.1} parent=11 // pred_check
        %p793 = pneg %p605
      $region98: #{forward.1} parent=11 // pred_check_branch
        %795 = sbr.rel (%p793) target = $region100
      $region99: #{forward.1} parent=11 // pred_region
        _
      $region100: #{forward.1} parent=11 // pred_fallthru
        _
      // Predicated region
      $region101: #{forward.1} parent=11 // pred_check
        %p796 = pneg %p626
      $region102: #{forward.1} parent=11 // pred_check_branch
        %798 = sbr.rel (%p796) target = $region104
      $region103: #{forward.1} parent=11 // pred_region
        _
      $region104: #{forward.1} parent=11 // pred_fallthru
        _
      // Predicated region
      $region105: #{forward.1} parent=11 // pred_check
        %p799 = pneg %p647
      $region106: #{forward.1} parent=11 // pred_check_branch
        %801 = sbr.rel (%p799) target = $region108
      $region107: #{forward.1} parent=11 // pred_region
        _
      $region108: #{forward.1} parent=11 // pred_fallthru
        _
      // Predicated region
      $region109: #{forward.1} parent=11 // pred_check
        %p802 = pneg %p668
      $region110: #{forward.1} parent=11 // pred_check_branch
        %804 = sbr.rel (%p802) target = $region112
      $region111: #{forward.1} parent=11 // pred_region
        _
      $region112: #{forward.1} parent=11 // pred_fallthru
        _
      // Predicated region
      $region113: #{forward.1} parent=11 // pred_check
        %p805 = pneg %p689
      $region114: #{forward.1} parent=11 // pred_check_branch
        %807 = sbr.rel (%p805) target = $region116
      $region115: #{forward.1} parent=11 // pred_region
        _
      $region116: #{forward.1} parent=11 // pred_fallthru
        _
    $region12: #{forward.1} parent=5 // pred_fallthru
      _
    %p808 = scmp.lt.s32.totalorder %s65, 2
    // Predicated region
    $region117: #{forward.1} parent=5 // pred_check
      %p809 = pneg %p808
    $region118: #{forward.1} parent=5 // pred_check_branch
      %811 = sbr.rel (%p809) target = $region120
    $region119: #{forward.1} parent=5 // pred_region
      // Predicated region
      $region121: #{forward.1} parent=119 // pred_check
        %p812 = pneg %p85
      $region122: #{forward.1} parent=119 // pred_check_branch
        %814 = sbr.rel (%p812) target = $region124
      $region123: #{forward.1} parent=119 // pred_region
        %s815 = smul.u32 2, %s65
        %p816 = scmp.lt.s32.totalorder %s815, 3
        %s817 = scalar_select %p816, %s815, 3
        %s818 = smul.addr %s817, 8
        %s819 = scalar_lea.vmem %s1, %s818
        %s820 = smul.u32 2, %s65
      $region124: #{forward.1} parent=119 // pred_fallthru
        _
      // Predicated region
      $region125: #{forward.1} parent=119 // pred_check
        %p821 = pneg %p111
      $region126: #{forward.1} parent=119 // pred_check_branch
        %823 = sbr.rel (%p821) target = $region128
      $region127: #{forward.1} parent=119 // pred_region
        %s824 = smul.u32 2, %s65
        %p825 = scmp.lt.s32.totalorder %s824, 3
        %s826 = scalar_select %p825, %s824, 3
        %s827 = smul.addr %s826, 8
        %s828 = scalar_lea.vmem %s3, %s827
        %s829 = smul.u32 2, %s65
      $region128: #{forward.1} parent=119 // pred_fallthru
        _
      // Predicated region
      $region129: #{forward.1} parent=119 // pred_check
        %p830 = pneg %p137
      $region130: #{forward.1} parent=119 // pred_check_branch
        %832 = sbr.rel (%p830) target = $region132
      $region131: #{forward.1} parent=119 // pred_region
        %s833 = smul.u32 2, %s65
        %p834 = scmp.lt.s32.totalorder %s833, 3
        %s835 = scalar_select %p834, %s833, 3
        %s836 = smul.addr %s835, 8
        %s837 = scalar_lea.vmem %s5, %s836
        %s838 = smul.u32 2, %s65
      $region132: #{forward.1} parent=119 // pred_fallthru
        _
    $region120: #{forward.1} parent=5 // pred_fallthru
      _
    %p839 = scmp.le.s32.totalorder 1, %s65
    %p840 = scmp.lt.s32.totalorder %s65, 3
    %p841 = pnand %p839, %p840
    %p842 = pneg %p841
    // Predicated region
    $region133: #{forward.1} parent=5 // pred_check
      _
    $region134: #{forward.1} parent=5 // pred_check_branch
      %844 = sbr.rel (%p841) target = $region136
    $region135: #{forward.1} parent=5 // pred_region
      %s845 = ssub.s32 %s65, 1
      %s846 = smul.u32 2, %s70
      %p847 = scmp.lt.s32.totalorder %s846, 3
      %s848 = scalar_select %p847, %s846, 3
      %s849 = smul.addr %s848, 8
      %s850 = scalar_lea.vmem %s1, %s849
      %p851 = pneg %p91
      %p852 = pneg %p88
      %s853 = smul.u32 2, %s70
      %p854 = scmp.lt.s32.totalorder %s853, 3
      %s855 = scalar_select %p854, %s853, 3
      %s856 = smul.addr %s855, 8
      %s857 = scalar_lea.vmem %s3, %s856
      %p858 = pneg %p117
      %p859 = pneg %p114
      %s860 = smul.u32 2, %s70
      %p861 = scmp.lt.s32.totalorder %s860, 3
      %s862 = scalar_select %p861, %s860, 3
      %s863 = smul.addr %s862, 8
      %s864 = scalar_lea.vmem %s5, %s863
      %p865 = pneg %p143
      %p866 = pneg %p140
      %p867 = pneg %p164
      %p868 = pneg %p161
      %p869 = pneg %p185
      %p870 = pneg %p182
      %p871 = pneg %p206
      %p872 = pneg %p203
      %p873 = pneg %p227
      %p874 = pneg %p224
      %p875 = pneg %p248
      %p876 = pneg %p245
      %p877 = pneg %p269
      %p878 = pneg %p266
      %p879 = pneg %p290
      %p880 = pneg %p287
      %p881 = pneg %p311
      %p882 = pneg %p308
      %p883 = pneg %p332
      %p884 = pneg %p329
      %p885 = pneg %p353
      %p886 = pneg %p350
      %p887 = pneg %p374
      %p888 = pneg %p371
      %p889 = pneg %p395
      %p890 = pneg %p392
      %p891 = pneg %p416
      %p892 = pneg %p413
      %p893 = pneg %p437
      %p894 = pneg %p434
      %p895 = pneg %p458
      %p896 = pneg %p455
      %p897 = pneg %p479
      %p898 = pneg %p476
      %p899 = pneg %p500
      %p900 = pneg %p497
      %p901 = pneg %p521
      %p902 = pneg %p518
      %p903 = pneg %p542
      %p904 = pneg %p539
      %p905 = pneg %p563
      %p906 = pneg %p560
      %p907 = pneg %p584
      %p908 = pneg %p581
      %p909 = pneg %p605
      %p910 = pneg %p602
      %p911 = pneg %p626
      %p912 = pneg %p623
      %p913 = pneg %p647
      %p914 = pneg %p644
      %p915 = pneg %p668
      %p916 = pneg %p665
      %p917 = pneg %p689
      %p918 = pneg %p686
      %p919 = pneg %p715
      %p920 = pneg %p712
      %s921 = smul.u32 2, %s70
      %p922 = scmp.lt.s32.totalorder %s921, 3
      %s923 = scalar_select %p922, %s921, 3
      %s924 = smul.addr %s923, 3
      %s925 = smul.addr %s924, 8
      %s926 = scalar_lea.vmem %s59, %s925
      %s927 = smul.u32 2, %s70
      %p928 = scmp.lt.s32.totalorder %s927, 3
      %s929 = scalar_select %p928, %s927, 3
      %s930 = smul.addr %s929, 8
      %s931 = scalar_lea.vmem %s1, %s930
      %s932 = smul.u32 2, %s70
      %s933 = smul.u32 2, %s70
      %p934 = scmp.lt.s32.totalorder %s933, 3
      %s935 = scalar_select %p934, %s933, 3
      %s936 = smul.addr %s935, 8
      %s937 = scalar_lea.vmem %s3, %s936
      %s938 = smul.u32 2, %s70
      %s939 = smul.u32 2, %s70
      %p940 = scmp.lt.s32.totalorder %s939, 3
      %s941 = scalar_select %p940, %s939, 3
      %s942 = smul.addr %s941, 8
      %s943 = scalar_lea.vmem %s5, %s942
      %s944 = smul.u32 2, %s70
      %s945 = smul.u32 2, %s70
      %p946 = scmp.lt.s32.totalorder %s945, 3
      %s947 = scalar_select %p946, %s945, 3
      %s948 = smul.addr %s947, 3
      %s949 = smul.addr %s948, 8
      %s950 = scalar_lea.vmem %s59, %s949
      %s951 = smul.u32 2, %s70
      %v953 = vld [vmem:[%s931] sm:$0xff]
      %v954 = vld [vmem:[%s931 + $0x8] sm:$0xff]
      %vm955 = vcmp.eq.f32.partialorder %v953, %v953
      %vm956 = vcmp.eq.f32.partialorder %v954, %v954
      %v957 = vand.u32 2147483647, %v953
      %v958 = vand.u32 2147483647, %v954
      %vm959 = vcmp.lt.f32.partialorder %v957, inf
      %vm960 = vcmp.lt.f32.partialorder %v958, inf
      %vm961 = vmand %vm955, %vm959
      %vm962 = vmand %vm956, %vm960
      %v963 = vsel %vm961, %v953, 0.0
      %v964 = vsel %vm962, %v954, 0.0
      %v965 = vld [vmem:[%s937] sm:$0xff]
      %v966 = vld [vmem:[%s937 + $0x8] sm:$0xff]
      %vm967 = vcmp.eq.f32.partialorder %v965, %v965
      %vm968 = vcmp.eq.f32.partialorder %v966, %v966
      %v969 = vand.u32 2147483647, %v965
      %v970 = vand.u32 2147483647, %v966
      %vm971 = vcmp.lt.f32.partialorder %v969, inf
      %vm972 = vcmp.lt.f32.partialorder %v970, inf
      %vm973 = vmand %vm967, %vm971
      %vm974 = vmand %vm968, %vm972
      %v975 = vsel %vm973, %v965, 0.0
      %v976 = vsel %vm974, %v966, 0.0
      %v977 = vld [vmem:[%s943] sm:$0xff]
      %v978 = vld [vmem:[%s943 + $0x8] sm:$0xff]
      %v979 = vpack.c.bf16 %v964, %v963
      %v980 = vld [vmem:[%s7] sm:$0xf]
      %v981 = vld [vmem:[%s7 + $0x4] sm:$0xf]
      %v982 = vld [vmem:[%s7 + $0x8] sm:$0xf]
      %v983 = vld [vmem:[%s7 + $0xc] sm:$0xf]
      %v984 = vld [vmem:[%s7 + $0x10] sm:$0xf]
      %v985 = vld [vmem:[%s7 + $0x14] sm:$0xf]
      %v986 = vld [vmem:[%s7 + $0x18] sm:$0xf]
      %v987 = vld [vmem:[%s7 + $0x1c] sm:$0xf]
      %v988 = vpack.c.bf16 %v976, %v975
      %v989 = vld [vmem:[%s9] sm:$0xf]
      %v990 = vld [vmem:[%s9 + $0x4] sm:$0xf]
      %v991 = vld [vmem:[%s9 + $0x8] sm:$0xf]
      %v992 = vld [vmem:[%s9 + $0xc] sm:$0xf]
      %v997 = vunpack.c.l.b16 %v989
      %v998 = vunpack.c.l.b16 %v990
      %v999 = vunpack.c.l.b16 %v991
      %v1000 = vunpack.c.l.b16 %v992
      %v1001 = vpack.c.b16 %v998, %v997
      %v1002 = vpack.c.b16 %v1000, %v999
      %vm1005 = vcmask 261120
      %v1007 = vsel %vm1005, %v988, 0
      %1009 = vmatpush.bf16.msra.mxu0 0
      %1010 = vmatpush.bf16.msra.mxu0 0
      %1011 = vmatpush.bf16.msra.mxu0 0
      %1012 = vmatpush.bf16.msra.mxu0 0
      %1013 = vmatpush.bf16.msra.mxu0 0
      %1014 = vmatpush.bf16.msra.mxu0 0
      %1015 = vmatpush.bf16.msra.mxu0 %v1002
      %1016 = vmatpush.bf16.msra.mxu0 %v1001
      %1017 = vmatmul.bf16.gmra.mxu0 %v1007
      %v1018 = vpop.f32.mrf.mxu0
      %v1019 = vadd.f32 0.0, %v1018
      %v1020 = vpop.f32.mrf.mxu0
      %v1021 = vadd.f32 0.0, %v1020
      %1022 = vdwg.mxu0
      %v1031 = vunpack.c.l.b16 %v980
      %v1032 = vunpack.c.l.b16 %v981
      %v1033 = vunpack.c.l.b16 %v982
      %v1034 = vunpack.c.l.b16 %v983
      %v1035 = vunpack.c.l.b16 %v984
      %v1036 = vunpack.c.l.b16 %v985
      %v1037 = vunpack.c.l.b16 %v986
      %v1038 = vunpack.c.l.b16 %v987
      %v1039 = vpack.c.b16 %v1032, %v1031
      %v1040 = vpack.c.b16 %v1034, %v1033
      %v1041 = vpack.c.b16 %v1036, %v1035
      %v1042 = vpack.c.b16 %v1038, %v1037
      %vm1047 = vcmask 523264
      %v1049 = vsel %vm1047, %v979, 0
      %1051 = vmatpush.bf16.msra.mxu0 0
      %1052 = vmatpush.bf16.msra.mxu0 0
      %1053 = vmatpush.bf16.msra.mxu0 0
      %1054 = vmatpush.bf16.msra.mxu0 0
      %1055 = vmatpush.bf16.msra.mxu0 %v1042
      %1056 = vmatpush.bf16.msra.mxu0 %v1041
      %1057 = vmatpush.bf16.msra.mxu0 %v1040
      %1058 = vmatpush.bf16.msra.mxu0 %v1039
      %1059 = vmatmul.bf16.gmra.mxu0 %v1049
      %v1060 = vpop.f32.mrf.mxu0
      %v1061 = vadd.f32 %v1019, %v1060
      %v1062 = vpop.f32.mrf.mxu0
      %v1063 = vadd.f32 %v1021, %v1062
      %1064 = vdwg.mxu0
      %v1065 = vld [vmem:[%s51] sm:$0x1]
      %v1067 = vperm.slane %v1065, 0
      %v1069 = vadd.f32 %v1061, %v1067
      %v1070 = vadd.f32 %v1063, %v1067
      %v1071 = vmax.f32 %v1069, 0.0
      %v1072 = vmax.f32 %v1070, 0.0
      %v1073 = vpack.c.bf16 %v1072, %v1071
      %v1074 = vld [vmem:[%s11] sm:$0xf]
      %v1075 = vld [vmem:[%s11 + $0x4] sm:$0xf]
      %v1076 = vld [vmem:[%s11 + $0x8] sm:$0xf]
      %v1077 = vld [vmem:[%s11 + $0xc] sm:$0xf]
      %v1078 = vld [vmem:[%s11 + $0x10] sm:$0xf]
      %v1079 = vld [vmem:[%s11 + $0x14] sm:$0xf]
      %v1080 = vld [vmem:[%s51 + $0x1] sm:$0x1]
      %v1082 = vperm.slane %v1080, 0
      %v1090 = vunpack.c.l.b16 %v1074
      %v1091 = vunpack.c.l.b16 %v1075
      %v1092 = vunpack.c.l.b16 %v1076
      %v1093 = vunpack.c.l.b16 %v1077
      %v1094 = vunpack.c.l.b16 %v1078
      %v1095 = vunpack.c.l.b16 %v1079
      %v1096 = vpack.c.b16 %v1091, %v1090
      %v1097 = vpack.c.b16 %v1093, %v1092
      %v1098 = vpack.c.b16 %v1095, %v1094
      %vm1102 = vcmask 392192
      %v1104 = vsel %vm1102, %v1073, 0
      %1106 = vmatpush.bf16.msra.mxu0 0
      %1107 = vmatpush.bf16.msra.mxu0 0
      %1108 = vmatpush.bf16.msra.mxu0 0
      %1109 = vmatpush.bf16.msra.mxu0 0
      %1110 = vmatpush.bf16.msra.mxu0 0
      %1111 = vmatpush.bf16.msra.mxu0 %v1098
      %1112 = vmatpush.bf16.msra.mxu0 %v1097
      %1113 = vmatpush.bf16.msra.mxu0 %v1096
      %1114 = vmatmul.bf16.gmra.mxu0 %v1104
      %v1115 = vpop.f32.mrf.mxu0
      %v1116 = vadd.f32 %v1082, %v1115
      %v1117 = vpop.f32.mrf.mxu0
      %v1118 = vadd.f32 %v1082, %v1117
      %1119 = vdwg.mxu0
      %v1120 = vmax.f32 %v1116, 0.0
      %v1121 = vmax.f32 %v1118, 0.0
      %v1122 = vpack.c.bf16 %v1121, %v1120
      %v1123 = vld [vmem:[%s13] sm:$0xf]
      %v1124 = vld [vmem:[%s13 + $0x4] sm:$0xf]
      %v1125 = vld [vmem:[%s51 + $0x2] sm:$0x1]
      %v1127 = vperm.slane %v1125, 0
      %v1131 = vunpack.c.l.b16 %v1123
      %v1132 = vunpack.c.l.b16 %v1124
      %v1133 = vpack.c.b16 %v1132, %v1131
      %vm1135 = vcmask 130048
      %v1137 = vsel %vm1135, %v1122, 0
      %1139 = vmatpush.bf16.msra.mxu0 0
      %1140 = vmatpush.bf16.msra.mxu0 0
      %1141 = vmatpush.bf16.msra.mxu0 0
      %1142 = vmatpush.bf16.msra.mxu0 0
      %1143 = vmatpush.bf16.msra.mxu0 0
      %1144 = vmatpush.bf16.msra.mxu0 0
      %1145 = vmatpush.bf16.msra.mxu0 0
      %1146 = vmatpush.bf16.msra.mxu0 %v1133
      %1147 = vmatmul.bf16.gmra.mxu0 %v1137
      %v1148 = vpop.f32.mrf.mxu0
      %v1149 = vadd.f32 %v1127, %v1148
      %v1150 = vpop.f32.mrf.mxu0
      %v1151 = vadd.f32 %v1127, %v1150
      %1152 = vdwg.mxu0
      %v1153 = vld [vmem:[%s15] sm:$0xf]
      %v1154 = vld [vmem:[%s15 + $0x4] sm:$0xf]
      %v1155 = vld [vmem:[%s15 + $0x8] sm:$0xf]
      %v1156 = vld [vmem:[%s15 + $0xc] sm:$0xf]
      %v1157 = vld [vmem:[%s15 + $0x10] sm:$0xf]
      %v1158 = vld [vmem:[%s15 + $0x14] sm:$0xf]
      %v1159 = vld [vmem:[%s15 + $0x18] sm:$0xf]
      %v1160 = vld [vmem:[%s15 + $0x1c] sm:$0xf]
      %v1161 = vpack.c.bf16 %v978, %v977
      %v1162 = vld [vmem:[%s17] sm:$0xf]
      %vm1163 = vcmask 64512
      %v1165 = vsel %vm1163, %v1161, 0
      %vm1167 = vcmask 1043456
      %v1169 = vsel %vm1167, %v1162, 0
      %1171 = vmatpush.bf16.msra.mxu0 0
      %1172 = vmatpush.bf16.msra.mxu0 0
      %1173 = vmatpush.bf16.msra.mxu0 0
      %1174 = vmatpush.bf16.msra.mxu0 0
      %1175 = vmatpush.bf16.msra.mxu0 0
      %1176 = vmatpush.bf16.msra.mxu0 0
      %1177 = vmatpush.bf16.msra.mxu0 0
      %1178 = vmatpush.bf16.msra.mxu0 %v1169
      %1179 = vmatmul.bf16.gmra.mxu0 %v1165
      %v1180 = vpop.f32.mrf.mxu0
      %v1181 = vadd.f32 0.0, %v1180
      %v1182 = vpop.f32.mrf.mxu0
      %v1183 = vadd.f32 0.0, %v1182
      %1184 = vdwg.mxu0
      %v1193 = vunpack.c.l.b16 %v1153
      %v1194 = vunpack.c.l.b16 %v1154
      %v1195 = vunpack.c.l.b16 %v1155
      %v1196 = vunpack.c.l.b16 %v1156
      %v1197 = vunpack.c.l.b16 %v1157
      %v1198 = vunpack.c.l.b16 %v1158
      %v1199 = vunpack.c.l.b16 %v1159
      %v1200 = vunpack.c.l.b16 %v1160
      %v1201 = vpack.c.b16 %v1194, %v1193
      %v1202 = vpack.c.b16 %v1196, %v1195
      %v1203 = vpack.c.b16 %v1198, %v1197
      %v1204 = vpack.c.b16 %v1200, %v1199
      %1209 = vmatpush.bf16.msra.mxu0 0
      %1210 = vmatpush.bf16.msra.mxu0 0
      %1211 = vmatpush.bf16.msra.mxu0 0
      %1212 = vmatpush.bf16.msra.mxu0 0
      %1213 = vmatpush.bf16.msra.mxu0 %v1204
      %1214 = vmatpush.bf16.msra.mxu0 %v1203
      %1215 = vmatpush.bf16.msra.mxu0 %v1202
      %1216 = vmatpush.bf16.msra.mxu0 %v1201
      %1217 = vmatmul.bf16.gmra.mxu0 %v1049
      %v1218 = vpop.f32.mrf.mxu0
      %v1219 = vadd.f32 %v1181, %v1218
      %v1220 = vpop.f32.mrf.mxu0
      %v1221 = vadd.f32 %v1183, %v1220
      %1222 = vdwg.mxu0
      %v1223 = vld [vmem:[%s51 + $0x3] sm:$0x1]
      %v1225 = vperm.slane %v1223, 0
      %v1227 = vadd.f32 %v1219, %v1225
      %v1228 = vadd.f32 %v1221, %v1225
      %v1229 = vmax.f32 %v1227, 0.0
      %v1230 = vmax.f32 %v1228, 0.0
      %v1231 = vpack.c.bf16 %v1230, %v1229
      %v1232 = vld [vmem:[%s19] sm:$0xf]
      %v1233 = vld [vmem:[%s19 + $0x4] sm:$0xf]
      %v1234 = vld [vmem:[%s19 + $0x8] sm:$0xf]
      %v1235 = vld [vmem:[%s19 + $0xc] sm:$0xf]
      %v1236 = vld [vmem:[%s19 + $0x10] sm:$0x3]
      %v1237 = vld [vmem:[%s51 + $0x4] sm:$0x1]
      %v1239 = vperm.slane %v1237, 0
      %v1246 = vunpack.c.l.b16 %v1232
      %v1247 = vunpack.c.l.b16 %v1233
      %v1248 = vunpack.c.l.b16 %v1234
      %v1249 = vunpack.c.l.b16 %v1235
      %v1250 = vunpack.c.l.b16 %v1236
      %v1251 = vpack.c.b16 %v1247, %v1246
      %v1252 = vpack.c.b16 %v1249, %v1248
      %v1253 = vpack.c.b16 %v1250, %v1250
      %vm1256 = vcmask 293888
      %v1258 = vsel %vm1256, %v1231, 0
      %vm1260 = vcmask 1041408
      %v1262 = vsel %vm1260, %v1253, 0
      %1264 = vmatpush.bf16.msra.mxu0 0
      %1265 = vmatpush.bf16.msra.mxu0 0
      %1266 = vmatpush.bf16.msra.mxu0 0
      %1267 = vmatpush.bf16.msra.mxu0 0
      %1268 = vmatpush.bf16.msra.mxu0 0
      %1269 = vmatpush.bf16.msra.mxu0 %v1262
      %1270 = vmatpush.bf16.msra.mxu0 %v1252
      %1271 = vmatpush.bf16.msra.mxu0 %v1251
      %1272 = vmatmul.bf16.gmra.mxu0 %v1258
      %v1273 = vpop.f32.mrf.mxu0
      %v1274 = vadd.f32 %v1239, %v1273
      %v1275 = vpop.f32.mrf.mxu0
      %v1276 = vadd.f32 %v1239, %v1275
      %1277 = vdwg.mxu0
      %v1278 = vmax.f32 %v1274, 0.0
      %v1279 = vmax.f32 %v1276, 0.0
      %v1280 = vpack.c.bf16 %v1279, %v1278
      %v1281 = vld [vmem:[%s21] sm:$0xf]
      %v1282 = vld [vmem:[%s21 + $0x4] sm:$0xf]
      %v1283 = vld [vmem:[%s51 + $0x5] sm:$0x1]
      %v1285 = vperm.slane %v1283, 0
      %v1289 = vunpack.c.l.b16 %v1281
      %v1290 = vunpack.c.l.b16 %v1282
      %v1291 = vpack.c.b16 %v1290, %v1289
      %v1294 = vsel %vm1135, %v1280, 0
      %1296 = vmatpush.bf16.msra.mxu0 0
      %1297 = vmatpush.bf16.msra.mxu0 0
      %1298 = vmatpush.bf16.msra.mxu0 0
      %1299 = vmatpush.bf16.msra.mxu0 0
      %1300 = vmatpush.bf16.msra.mxu0 0
      %1301 = vmatpush.bf16.msra.mxu0 0
      %1302 = vmatpush.bf16.msra.mxu0 0
      %1303 = vmatpush.bf16.msra.mxu0 %v1291
      %1304 = vmatmul.bf16.gmra.mxu0 %v1294
      %v1305 = vpop.f32.mrf.mxu0
      %v1306 = vadd.f32 %v1285, %v1305
      %v1307 = vpop.f32.mrf.mxu0
      %v1308 = vadd.f32 %v1285, %v1307
      %1309 = vdwg.mxu0
      %v1310 = vld [vmem:[%s23] sm:$0xf]
      %v1311 = vld [vmem:[%s23 + $0x4] sm:$0xf]
      %v1312 = vld [vmem:[%s23 + $0x8] sm:$0xf]
      %v1313 = vld [vmem:[%s23 + $0xc] sm:$0xf]
      %v1314 = vld [vmem:[%s25] sm:$0xf]
      %v1316 = vsel %vm1167, %v1314, 0
      %1318 = vmatpush.bf16.msra.mxu0 0
      %1319 = vmatpush.bf16.msra.mxu0 0
      %1320 = vmatpush.bf16.msra.mxu0 0
      %1321 = vmatpush.bf16.msra.mxu0 0
      %1322 = vmatpush.bf16.msra.mxu0 0
      %1323 = vmatpush.bf16.msra.mxu0 0
      %1324 = vmatpush.bf16.msra.mxu0 0
      %1325 = vmatpush.bf16.msra.mxu0 %v1316
      %1326 = vmatmul.bf16.gmra.mxu0 %v1165
      %v1327 = vpop.f32.mrf.mxu0
      %v1328 = vadd.f32 0.0, %v1327
      %v1329 = vpop.f32.mrf.mxu0
      %v1330 = vadd.f32 0.0, %v1329
      %1331 = vdwg.mxu0
      %v1336 = vunpack.c.l.b16 %v1310
      %v1337 = vunpack.c.l.b16 %v1311
      %v1338 = vunpack.c.l.b16 %v1312
      %v1339 = vunpack.c.l.b16 %v1313
      %v1340 = vpack.c.b16 %v1337, %v1336
      %v1341 = vpack.c.b16 %v1339, %v1338
      %1344 = vmatpush.bf16.msra.mxu0 0
      %1345 = vmatpush.bf16.msra.mxu0 0
      %1346 = vmatpush.bf16.msra.mxu0 0
      %1347 = vmatpush.bf16.msra.mxu0 0
      %1348 = vmatpush.bf16.msra.mxu0 0
      %1349 = vmatpush.bf16.msra.mxu0 0
      %1350 = vmatpush.bf16.msra.mxu0 %v1341
      %1351 = vmatpush.bf16.msra.mxu0 %v1340
      %1352 = vmatmul.bf16.gmra.mxu0 %v1007
      %v1353 = vpop.f32.mrf.mxu0
      %v1354 = vadd.f32 %v1328, %v1353
      %v1355 = vpop.f32.mrf.mxu0
      %v1356 = vadd.f32 %v1330, %v1355
      %1357 = vdwg.mxu0
      %v1358 = vld [vmem:[%s51 + $0x6] sm:$0x1]
      %v1360 = vperm.slane %v1358, 0
      %v1362 = vadd.f32 %v1354, %v1360
      %v1363 = vadd.f32 %v1356, %v1360
      %v1364 = vmax.f32 %v1362, 0.0
      %v1365 = vmax.f32 %v1363, 0.0
      %v1366 = vpack.c.bf16 %v1365, %v1364
      %v1367 = vld [vmem:[%s27] sm:$0xf]
      %v1368 = vld [vmem:[%s27 + $0x4] sm:$0xf]
      %v1369 = vld [vmem:[%s27 + $0x8] sm:$0x3]
      %v1370 = vld [vmem:[%s51 + $0x7] sm:$0x1]
      %v1372 = vperm.slane %v1370, 0
      %v1377 = vunpack.c.l.b16 %v1367
      %v1378 = vunpack.c.l.b16 %v1368
      %v1379 = vunpack.c.l.b16 %v1369
      %v1380 = vpack.c.b16 %v1378, %v1377
      %v1381 = vpack.c.b16 %v1379, %v1379
      %vm1383 = vcmask 162816
      %v1385 = vsel %vm1383, %v1366, 0
      %v1388 = vsel %vm1260, %v1381, 0
      %1390 = vmatpush.bf16.msra.mxu0 0
      %1391 = vmatpush.bf16.msra.mxu0 0
      %1392 = vmatpush.bf16.msra.mxu0 0
      %1393 = vmatpush.bf16.msra.mxu0 0
      %1394 = vmatpush.bf16.msra.mxu0 0
      %1395 = vmatpush.bf16.msra.mxu0 0
      %1396 = vmatpush.bf16.msra.mxu0 %v1388
      %1397 = vmatpush.bf16.msra.mxu0 %v1380
      %1398 = vmatmul.bf16.gmra.mxu0 %v1385
      %v1399 = vpop.f32.mrf.mxu0
      %v1400 = vadd.f32 %v1372, %v1399
      %v1401 = vpop.f32.mrf.mxu0
      %v1402 = vadd.f32 %v1372, %v1401
      %1403 = vdwg.mxu0
      %v1404 = vmax.f32 %v1400, 0.0
      %v1405 = vmax.f32 %v1402, 0.0
      %v1406 = vpack.c.bf16 %v1405, %v1404
      %v1407 = vld [vmem:[%s29] sm:$0xf]
      %v1408 = vld [vmem:[%s29 + $0x4] sm:$0xf]
      %v1409 = vld [vmem:[%s51 + $0x8] sm:$0x1]
      %v1411 = vperm.slane %v1409, 0
      %v1415 = vunpack.c.l.b16 %v1407
      %v1416 = vunpack.c.l.b16 %v1408
      %v1417 = vpack.c.b16 %v1416, %v1415
      %v1420 = vsel %vm1135, %v1406, 0
      %1422 = vmatpush.bf16.msra.mxu0 0
      %1423 = vmatpush.bf16.msra.mxu0 0
      %1424 = vmatpush.bf16.msra.mxu0 0
      %1425 = vmatpush.bf16.msra.mxu0 0
      %1426 = vmatpush.bf16.msra.mxu0 0
      %1427 = vmatpush.bf16.msra.mxu0 0
      %1428 = vmatpush.bf16.msra.mxu0 0
      %1429 = vmatpush.bf16.msra.mxu0 %v1417
      %1430 = vmatmul.bf16.gmra.mxu0 %v1420
      %v1431 = vpop.f32.mrf.mxu0
      %v1432 = vadd.f32 %v1411, %v1431
      %v1433 = vpop.f32.mrf.mxu0
      %v1434 = vadd.f32 %v1411, %v1433
      %1435 = vdwg.mxu0
      %v1436 = vpack.c.bf16 %v1151, %v1149
      %v1437 = vld [vmem:[%s31] sm:$0x3]
      %v1438 = vpack.c.bf16 %v1308, %v1306
      %v1439 = vld [vmem:[%s33] sm:$0x3]
      %vm1440 = vcmask 31744
      %v1442 = vsel %vm1440, %v1438, 0
      %v1445 = vsel %vm1260, %v1439, 0
      %1447 = vmatpush.bf16.msra.mxu0 0
      %1448 = vmatpush.bf16.msra.mxu0 0
      %1449 = vmatpush.bf16.msra.mxu0 0
      %1450 = vmatpush.bf16.msra.mxu0 0
      %1451 = vmatpush.bf16.msra.mxu0 0
      %1452 = vmatpush.bf16.msra.mxu0 0
      %1453 = vmatpush.bf16.msra.mxu0 0
      %1454 = vmatpush.bf16.msra.mxu0 %v1445
      %1455 = vmatmul.bf16.gmra.mxu0 %v1442
      %v1456 = vpop.f32.mrf.mxu0
      %v1457 = vadd.f32 0.0, %v1456
      %v1458 = vpop.f32.mrf.mxu0
      %v1459 = vadd.f32 0.0, %v1458
      %1460 = vdwg.mxu0
      %v1462 = vsel %vm1440, %v1436, 0
      %v1465 = vsel %vm1260, %v1437, 0
      %1467 = vmatpush.bf16.msra.mxu0 0
      %1468 = vmatpush.bf16.msra.mxu0 0
      %1469 = vmatpush.bf16.msra.mxu0 0
      %1470 = vmatpush.bf16.msra.mxu0 0
      %1471 = vmatpush.bf16.msra.mxu0 0
      %1472 = vmatpush.bf16.msra.mxu0 0
      %1473 = vmatpush.bf16.msra.mxu0 0
      %1474 = vmatpush.bf16.msra.mxu0 %v1465
      %1475 = vmatmul.bf16.gmra.mxu0 %v1462
      %v1476 = vpop.f32.mrf.mxu0
      %v1477 = vadd.f32 %v1457, %v1476
      %v1478 = vpop.f32.mrf.mxu0
      %v1479 = vadd.f32 %v1459, %v1478
      %1480 = vdwg.mxu0
      %v1481 = vld [vmem:[%s35] sm:$0xf]
      %v1483 = vsel %vm1167, %v1481, 0
      %1485 = vmatpush.bf16.msra.mxu0 0
      %1486 = vmatpush.bf16.msra.mxu0 0
      %1487 = vmatpush.bf16.msra.mxu0 0
      %1488 = vmatpush.bf16.msra.mxu0 0
      %1489 = vmatpush.bf16.msra.mxu0 0
      %1490 = vmatpush.bf16.msra.mxu0 0
      %1491 = vmatpush.bf16.msra.mxu0 0
      %1492 = vmatpush.bf16.msra.mxu0 %v1483
      %1493 = vmatmul.bf16.gmra.mxu0 %v1165
      %v1494 = vpop.f32.mrf.mxu0
      %v1495 = vadd.f32 0.0, %v1494
      %v1496 = vpop.f32.mrf.mxu0
      %v1497 = vadd.f32 0.0, %v1496
      %1498 = vdwg.mxu0
      %v1499 = vadd.f32 %v1477, %v1495
      %v1500 = vadd.f32 %v1479, %v1497
      %v1501 = vld [vmem:[%s51 + $0x9] sm:$0x1]
      %v1503 = vperm.slane %v1501, 0
      %v1505 = vadd.f32 %v1499, %v1503
      %v1506 = vadd.f32 %v1500, %v1503
      %v1507 = vmax.f32 %v1505, 0.0
      %v1508 = vmax.f32 %v1506, 0.0
      %v1509 = vpack.c.bf16 %v1508, %v1507
      %v1510 = vld [vmem:[%s37] sm:$0xf]
      %v1511 = vld [vmem:[%s51 + $0xa] sm:$0x1]
      %v1513 = vperm.slane %v1511, 0
      %v1516 = vsel %vm1163, %v1509, 0
      %v1519 = vsel %vm1167, %v1510, 0
      %1521 = vmatpush.bf16.msra.mxu0 0
      %1522 = vmatpush.bf16.msra.mxu0 0
      %1523 = vmatpush.bf16.msra.mxu0 0
      %1524 = vmatpush.bf16.msra.mxu0 0
      %1525 = vmatpush.bf16.msra.mxu0 0
      %1526 = vmatpush.bf16.msra.mxu0 0
      %1527 = vmatpush.bf16.msra.mxu0 0
      %1528 = vmatpush.bf16.msra.mxu0 %v1519
      %1529 = vmatmul.bf16.gmra.mxu0 %v1516
      %v1530 = vpop.f32.mrf.mxu0
      %v1531 = vadd.f32 %v1513, %v1530
      %v1532 = vpop.f32.mrf.mxu0
      %v1533 = vadd.f32 %v1513, %v1532
      %1534 = vdwg.mxu0
      %v1535 = vmax.f32 %v1531, 0.0
      %v1536 = vmax.f32 %v1533, 0.0
      %v1537 = vpack.c.bf16 %v1536, %v1535
      %v1538 = vld [vmem:[%s39] sm:$0xf]
      %v1539 = vld [vmem:[%s39 + $0x4] sm:$0xf]
      %v1540 = vld [vmem:[%s51 + $0xb] sm:$0x1]
      %v1542 = vperm.slane %v1540, 0
      %v1546 = vunpack.c.l.b16 %v1538
      %v1547 = vunpack.c.l.b16 %v1539
      %v1548 = vpack.c.b16 %v1547, %v1546
      %v1551 = vsel %vm1135, %v1537, 0
      %1553 = vmatpush.bf16.msra.mxu0 0
      %1554 = vmatpush.bf16.msra.mxu0 0
      %1555 = vmatpush.bf16.msra.mxu0 0
      %1556 = vmatpush.bf16.msra.mxu0 0
      %1557 = vmatpush.bf16.msra.mxu0 0
      %1558 = vmatpush.bf16.msra.mxu0 0
      %1559 = vmatpush.bf16.msra.mxu0 0
      %1560 = vmatpush.bf16.msra.mxu0 %v1548
      %1561 = vmatmul.bf16.gmra.mxu0 %v1551
      %v1562 = vpop.f32.mrf.mxu0
      %v1563 = vadd.f32 %v1542, %v1562
      %v1564 = vpop.f32.mrf.mxu0
      %v1565 = vadd.f32 %v1542, %v1564
      %1566 = vdwg.mxu0
      %v1567 = vld [vmem:[%s41] sm:$0x3]
      %v1568 = vpack.c.bf16 %v1434, %v1432
      %v1569 = vld [vmem:[%s43] sm:$0x3]
      %v1571 = vsel %vm1440, %v1568, 0
      %v1574 = vsel %vm1260, %v1569, 0
      %1576 = vmatpush.bf16.msra.mxu0 0
      %1577 = vmatpush.bf16.msra.mxu0 0
      %1578 = vmatpush.bf16.msra.mxu0 0
      %1579 = vmatpush.bf16.msra.mxu0 0
      %1580 = vmatpush.bf16.msra.mxu0 0
      %1581 = vmatpush.bf16.msra.mxu0 0
      %1582 = vmatpush.bf16.msra.mxu0 0
      %1583 = vmatpush.bf16.msra.mxu0 %v1574
      %1584 = vmatmul.bf16.gmra.mxu0 %v1571
      %v1585 = vpop.f32.mrf.mxu0
      %v1586 = vadd.f32 0.0, %v1585
      %v1587 = vpop.f32.mrf.mxu0
      %v1588 = vadd.f32 0.0, %v1587
      %1589 = vdwg.mxu0
      %v1591 = vsel %vm1260, %v1567, 0
      %1593 = vmatpush.bf16.msra.mxu0 0
      %1594 = vmatpush.bf16.msra.mxu0 0
      %1595 = vmatpush.bf16.msra.mxu0 0
      %1596 = vmatpush.bf16.msra.mxu0 0
      %1597 = vmatpush.bf16.msra.mxu0 0
      %1598 = vmatpush.bf16.msra.mxu0 0
      %1599 = vmatpush.bf16.msra.mxu0 0
      %1600 = vmatpush.bf16.msra.mxu0 %v1591
      %1601 = vmatmul.bf16.gmra.mxu0 %v1462
      %v1602 = vpop.f32.mrf.mxu0
      %v1603 = vadd.f32 %v1586, %v1602
      %v1604 = vpop.f32.mrf.mxu0
      %v1605 = vadd.f32 %v1588, %v1604
      %1606 = vdwg.mxu0
      %v1607 = vld [vmem:[%s45] sm:$0xf]
      %v1609 = vsel %vm1167, %v1607, 0
      %1611 = vmatpush.bf16.msra.mxu0 0
      %1612 = vmatpush.bf16.msra.mxu0 0
      %1613 = vmatpush.bf16.msra.mxu0 0
      %1614 = vmatpush.bf16.msra.mxu0 0
      %1615 = vmatpush.bf16.msra.mxu0 0
      %1616 = vmatpush.bf16.msra.mxu0 0
      %1617 = vmatpush.bf16.msra.mxu0 0
      %1618 = vmatpush.bf16.msra.mxu0 %v1609
      %1619 = vmatmul.bf16.gmra.mxu0 %v1165
      %v1620 = vpop.f32.mrf.mxu0
      %v1621 = vadd.f32 0.0, %v1620
      %v1622 = vpop.f32.mrf.mxu0
      %v1623 = vadd.f32 0.0, %v1622
      %1624 = vdwg.mxu0
      %v1625 = vadd.f32 %v1603, %v1621
      %v1626 = vadd.f32 %v1605, %v1623
      %v1627 = vld [vmem:[%s51 + $0xc] sm:$0x1]
      %v1629 = vperm.slane %v1627, 0
      %v1631 = vadd.f32 %v1625, %v1629
      %v1632 = vadd.f32 %v1626, %v1629
      %v1633 = vmax.f32 %v1631, 0.0
      %v1634 = vmax.f32 %v1632, 0.0
      %v1635 = vpack.c.bf16 %v1634, %v1633
      %v1636 = vld [vmem:[%s47] sm:$0x3]
      %v1637 = vld [vmem:[%s51 + $0xd] sm:$0x1]
      %v1639 = vperm.slane %v1637, 0
      %v1642 = vsel %vm1440, %v1635, 0
      %v1645 = vsel %vm1260, %v1636, 0
      %1647 = vmatpush.bf16.msra.mxu0 0
      %1648 = vmatpush.bf16.msra.mxu0 0
      %1649 = vmatpush.bf16.msra.mxu0 0
      %1650 = vmatpush.bf16.msra.mxu0 0
      %1651 = vmatpush.bf16.msra.mxu0 0
      %1652 = vmatpush.bf16.msra.mxu0 0
      %1653 = vmatpush.bf16.msra.mxu0 0
      %1654 = vmatpush.bf16.msra.mxu0 %v1645
      %1655 = vmatmul.bf16.gmra.mxu0 %v1642
      %v1656 = vpop.f32.mrf.mxu0
      %v1657 = vadd.f32 %v1639, %v1656
      %v1658 = vpop.f32.mrf.mxu0
      %v1659 = vadd.f32 %v1639, %v1658
      %1660 = vdwg.mxu0
      %v1661 = vmax.f32 %v1657, 0.0
      %v1662 = vmax.f32 %v1659, 0.0
      %v1663 = vpack.c.bf16 %v1662, %v1661
      %v1664 = vld [vmem:[%s49] sm:$0xf]
      %v1665 = vld [vmem:[%s51 + $0xe] sm:$0x1]
      %v1667 = vperm.slane %v1665, 0
      %v1670 = vsel %vm1163, %v1663, 0
      %v1673 = vsel %vm1167, %v1664, 0
      %1675 = vmatpush.bf16.msra.mxu0 0
      %1676 = vmatpush.bf16.msra.mxu0 0
      %1677 = vmatpush.bf16.msra.mxu0 0
      %1678 = vmatpush.bf16.msra.mxu0 0
      %1679 = vmatpush.bf16.msra.mxu0 0
      %1680 = vmatpush.bf16.msra.mxu0 0
      %1681 = vmatpush.bf16.msra.mxu0 0
      %1682 = vmatpush.bf16.msra.mxu0 %v1673
      %1683 = vmatmul.bf16.gmra.mxu0 %v1670
      %v1684 = vpop.f32.mrf.mxu0
      %v1685 = vadd.f32 %v1667, %v1684
      %v1686 = vpop.f32.mrf.mxu0
      %v1687 = vadd.f32 %v1667, %v1686
      %1688 = vdwg.mxu0
      %v1689 = vld [vmem:[%s53] sm:$0xf]
      %v1690 = vld [vmem:[%s55] sm:$0xf]
      %v1692 = vsel %vm1440, %v1306, 0
      %v1695 = vsel %vm1440, %v1308, 0
      %v1698 = vsel %vm1167, %v1690, 0
      %1700 = vmatpush.msra.mxu0 0.0
      %1701 = vmatpush.msra.mxu0 0.0
      %1702 = vmatpush.msra.mxu0 0.0
      %1703 = vmatpush.msra.mxu0 0.0
      %1704 = vmatpush.msra.mxu0 0.0
      %1705 = vmatpush.msra.mxu0 0.0
      %1706 = vmatpush.msra.mxu0 0.0
      %1707 = vmatpush.msra.mxu0 0.0
      %1708 = vmatpush.msra.mxu0 0.0
      %1709 = vmatpush.msra.mxu0 0.0
      %1710 = vmatpush.msra.mxu0 0.0
      %1711 = vmatpush.msra.mxu0 0.0
      %1712 = vmatpush.msra.mxu0 0.0
      %1713 = vmatpush.msra.mxu0 0.0
      %1714 = vmatpush.msra.mxu0 0.0
      %1715 = vmatpush.msra.mxu0 %v1698
      %1716 = vmatmul.f32.gmra.mxu0 %v1692
      %v1717 = vpop.f32.mrf.mxu0
      %v1718 = vadd.f32 0.0, %v1717
      %1719 = vmatmul.f32.gmra.mxu0 %v1695
      %v1720 = vpop.f32.mrf.mxu0
      %v1721 = vadd.f32 0.0, %v1720
      %1722 = vdwg.mxu0
      %v1724 = vsel %vm1440, %v1149, 0
      %v1727 = vsel %vm1440, %v1151, 0
      %v1730 = vsel %vm1167, %v1689, 0
      %1732 = vmatpush.msra.mxu0 0.0
      %1733 = vmatpush.msra.mxu0 0.0
      %1734 = vmatpush.msra.mxu0 0.0
      %1735 = vmatpush.msra.mxu0 0.0
      %1736 = vmatpush.msra.mxu0 0.0
      %1737 = vmatpush.msra.mxu0 0.0
      %1738 = vmatpush.msra.mxu0 0.0
      %1739 = vmatpush.msra.mxu0 0.0
      %1740 = vmatpush.msra.mxu0 0.0
      %1741 = vmatpush.msra.mxu0 0.0
      %1742 = vmatpush.msra.mxu0 0.0
      %1743 = vmatpush.msra.mxu0 0.0
      %1744 = vmatpush.msra.mxu0 0.0
      %1745 = vmatpush.msra.mxu0 0.0
      %1746 = vmatpush.msra.mxu0 0.0
      %1747 = vmatpush.msra.mxu0 %v1730
      %1748 = vmatmul.f32.gmra.mxu0 %v1724
      %v1749 = vpop.f32.mrf.mxu0
      %v1750 = vadd.f32 %v1718, %v1749
      %1751 = vmatmul.f32.gmra.mxu0 %v1727
      %v1752 = vpop.f32.mrf.mxu0
      %v1753 = vadd.f32 %v1721, %v1752
      %1754 = vdwg.mxu0
      %v1755 = vld [vmem:[%s57] sm:$0xf]
      %v1757 = vsel %vm1440, %v1432, 0
      %v1760 = vsel %vm1440, %v1434, 0
      %v1763 = vsel %vm1167, %v1755, 0
      %1765 = vmatpush.msra.mxu0 0.0
      %1766 = vmatpush.msra.mxu0 0.0
      %1767 = vmatpush.msra.mxu0 0.0
      %1768 = vmatpush.msra.mxu0 0.0
      %1769 = vmatpush.msra.mxu0 0.0
      %1770 = vmatpush.msra.mxu0 0.0
      %1771 = vmatpush.msra.mxu0 0.0
      %1772 = vmatpush.msra.mxu0 0.0
      %1773 = vmatpush.msra.mxu0 0.0
      %1774 = vmatpush.msra.mxu0 0.0
      %1775 = vmatpush.msra.mxu0 0.0
      %1776 = vmatpush.msra.mxu0 0.0
      %1777 = vmatpush.msra.mxu0 0.0
      %1778 = vmatpush.msra.mxu0 0.0
      %1779 = vmatpush.msra.mxu0 0.0
      %1780 = vmatpush.msra.mxu0 %v1763
      %1781 = vmatmul.f32.gmra.mxu0 %v1757
      %v1782 = vpop.f32.mrf.mxu0
      %v1783 = vadd.f32 0.0, %v1782
      %1784 = vmatmul.f32.gmra.mxu0 %v1760
      %v1785 = vpop.f32.mrf.mxu0
      %v1786 = vadd.f32 0.0, %v1785
      %1787 = vdwg.mxu0
      %v1788 = vadd.f32 %v1750, %v1783
      %v1789 = vadd.f32 %v1753, %v1786
      %1790 = vst [vmem:[%s950] sm:$0xff] %v1788
      %1791 = vst [vmem:[%s950 + $0x18] sm:$0xff] %v1789
      %1792 = vst.msk [vmem:[%s950 + $0x8] sm:$0xff] %vm1047, %v1563
      %1793 = vst.msk [vmem:[%s950 + $0x20] sm:$0xff] %vm1047, %v1565
      %1794 = vst.msk [vmem:[%s950 + $0x10] sm:$0xff] %vm1005, %v1685
      %1795 = vst.msk [vmem:[%s950 + $0x28] sm:$0xff] %vm1005, %v1687
      %s1796 = smul.u32 2, %s70
      %p1797 = scmp.lt.s32.totalorder %s1796, 3
      %s1798 = scalar_select %p1797, %s1796, 3
      %s1799 = smul.addr %s1798, 3
      %s1800 = smul.addr %s1799, 8
      %s1801 = scalar_lea.vmem %s59, %s1800
      // Predicated region
      $region137: #{forward.1} parent=135 // pred_check
        %p1802 = pneg %p712
      $region138: #{forward.1} parent=135 // pred_check_branch
        %1804 = sbr.rel (%p1802) target = $region140
      $region139: #{forward.1} parent=135 // pred_region
        %s1805 = smul.u32 2, %s70
      $region140: #{forward.1} parent=135 // pred_fallthru
        _
    $region136: #{forward.1} parent=5 // pred_fallthru
      _
    %p1806 = scmp.le.s32.totalorder 2, %s65
    // Predicated region
    $region141: #{forward.1} parent=5 // pred_check
      %p1807 = pneg %p1806
    $region142: #{forward.1} parent=5 // pred_check_branch
      %1809 = sbr.rel (%p1807) target = $region144
    $region143: #{forward.1} parent=5 // pred_region
      %s1810 = ssub.s32 %s65, 2
      // Predicated region
      $region145: #{forward.1} parent=143 // pred_check
        %p1811 = pneg %p718
      $region146: #{forward.1} parent=143 // pred_check_branch
        %1813 = sbr.rel (%p1811) target = $region148
      $region147: #{forward.1} parent=143 // pred_region
        %s1814 = smul.u32 2, %s71
        %p1815 = scmp.lt.s32.totalorder %s1814, 3
        %s1816 = scalar_select %p1815, %s1814, 3
        %s1817 = smul.addr %s1816, 3
        %s1818 = smul.addr %s1817, 8
        %s1819 = scalar_lea.vmem %s59, %s1818
      $region148: #{forward.1} parent=143 // pred_fallthru
        _
    $region144: #{forward.1} parent=5 // pred_fallthru
      _
  $region6: #{forward.1} parent=0 // loop_footer
    %s69 = sadd.s32 1, %s65
  $region7: #{forward.1} parent=0 // loop_footer_branch
    %64 = sbr.rel target = $region3
  $region8: #{forward.1} parent=0 // loop_exit
    _

</llo_original>
